<compile_context>
chip_gen: v7x
topology: tpu7x:2x2x1
jax: 0.10.0
libtpu: 0.0.40
codegen_flags: <defaults>
</compile_context>

<pallas_src>
import functools

import jax
import jax.numpy as jnp
from jax import lax
from jax.experimental import pallas as pl
from jax.experimental.pallas import tpu as pltpu

C_IN = 3
C_MID = 16
K = 3
L_IN = 64
L1 = (L_IN - K) // 2 + 1      # 31 : conv1 (k=3, stride=2, no pad)
L_OUT = 3                     # avgpool(3,3) -> 10, maxpool(3,3) -> 3
BN_EPS = 1e-5


def _block23_kernel(x_ref, w1_ref, s1_ref, w23_ref, s2_ref, pool_ref, vec_ref,
                    o_ref, *, batch):
    # constants (fetched once; identical block index every grid step)
    w1 = w1_ref[...]                       # (48, 3)   stacked conv1 taps
    w23 = w23_ref[...]                     # (96, 16)  stacked [conv2;conv3] taps
    pool = pool_ref[...]                   # (31, 9)   fused avg->max pooling matrix
    vecs = vec_ref[...]                    # (112, 31) packed per-channel vectors
    s1_0, s1_1, s1_2 = s1_ref[0], s1_ref[1], s1_ref[2]   # (64, 31) each
    s2_0, s2_1, s2_2 = s2_ref[0], s2_ref[1], s2_ref[2]   # (31, 31) each

    b1 = vecs[0:C_MID]                     # conv1 bias (relu sits before bn1)
    bn1s = vecs[C_MID:2 * C_MID]
    bn1b = vecs[2 * C_MID:3 * C_MID]
    bn23s = vecs[3 * C_MID:5 * C_MID]      # [bn2 scale; bn3 scale]
    bn23b = vecs[5 * C_MID:7 * C_MID]      # [bn2 shift+b2; bn3 shift+b3]

    for i in range(batch):                 # static unroll over samples in block
        x = x_ref[i]                       # (3, 64)

        # conv1 (k=3, s=2, p=0): weight-first, 1 + 3 matmuls
        u1 = jnp.dot(w1, x, preferred_element_type=jnp.float32)          # (48, 64)
        c1 = (jnp.dot(u1[0:C_MID], s1_0, preferred_element_type=jnp.float32)
              + jnp.dot(u1[C_MID:2 * C_MID], s1_1, preferred_element_type=jnp.float32)
              + jnp.dot(u1[2 * C_MID:3 * C_MID], s1_2, preferred_element_type=jnp.float32))
        x1 = jnp.maximum(c1 + b1, 0.0) * bn1s + bn1b                     # (16, 31)

        # conv2 + conv3 (k=3, s=1, p=1): fused, weight-first, 1 + 3 matmuls
        u23 = jnp.dot(w23, x1, preferred_element_type=jnp.float32)       # (96, 31)
        c23 = (jnp.dot(u23[0:2 * C_MID], s2_0, preferred_element_type=jnp.float32)
               + jnp.dot(u23[2 * C_MID:4 * C_MID], s2_1, preferred_element_type=jnp.float32)
               + jnp.dot(u23[4 * C_MID:6 * C_MID], s2_2, preferred_element_type=jnp.float32))
        t = c23 * bn23s + bn23b                                          # (32, 31)
        y = jnp.clip(t[0:C_MID], 0.0, 6.0)                               # relu6
        z = pl.reciprocal(1.0 + jnp.exp(-t[C_MID:2 * C_MID]), approx=True)  # sigmoid

        # channel concat + fused avgpool(3,3)->maxpool(3,3): one matmul + max tree
        cat = jnp.concatenate([x1, y, z], axis=0)                        # (48, 31)
        ar = jnp.dot(cat, pool, preferred_element_type=jnp.float32)      # (48, 9)
        o_ref[i] = jnp.maximum(jnp.maximum(ar[:, 0:L_OUT], ar[:, L_OUT:2 * L_OUT]),
                               ar[:, 2 * L_OUT:3 * L_OUT])               # (48, 3)


def test_block23_forward(x, params):
    f32 = jnp.float32
    n = x.shape[0]

    # batch B samples per grid step; keep >=2 steps so v7x megacore stays busy.
    batch = min(8, max(1, (n + 1) // 2))
    steps = -(-n // batch)
    n_pad = steps * batch
    x = x.astype(f32)
    if n_pad != n:
        x = jnp.concatenate([x, jnp.zeros((n_pad - n, C_IN, L_IN), f32)], axis=0)

    # conv-tap selection matrices (constants, parameter prep only)
    li = jnp.arange(L_IN)[:, None]
    lo = jnp.arange(L1)[None, :]
    s1 = jnp.stack([(li == 2 * lo + k).astype(f32) for k in range(K)])   # (3, 64, 31)
    mi = jnp.arange(L1)[:, None]
    s2 = jnp.stack([(mi == lo + k - 1).astype(f32) for k in range(K)])   # (3, 31, 31), implicit pad=1

    # fused avg->max pooling matrix, columns permuted so the 3 maxpool taps are
    # contiguous [0:3],[3:6],[6:9] lane slices of the matmul result.
    q = jnp.arange(3 * L_OUT)
    w = 3 * (q % 3) + q // 3
    i = jnp.arange(L1)[:, None]
    pool_mat = ((i >= 3 * w[None, :]) & (i < 3 * w[None, :] + 3)).astype(f32) / 3.0  # (31, 9)

    # stacked per-tap weights (weight-first conv formulation)
    w1 = params["w1"].astype(f32)          # (16, 3, 3)
    w2 = params["w2"].astype(f32)          # (16, 16, 3)
    w3 = params["w3"].astype(f32)          # (16, 16, 3)
    w1_stack = jnp.concatenate([w1[:, :, k] for k in range(K)], axis=0)               # (48, 3)
    w23_stack = jnp.concatenate(
        [jnp.concatenate([w2[:, :, k], w3[:, :, k]], axis=0) for k in range(K)], axis=0)  # (96, 16)

    # BN folding; b2/b3 fold into the bn2/bn3 shifts (bn follows conv directly).
    def bn_fold(p, bias=None):
        gamma, beta, mean, var = [v.astype(f32) for v in p]
        scale = gamma / jnp.sqrt(var + BN_EPS)
        shift = beta - mean * scale
        if bias is not None:
            shift = shift + bias.astype(f32) * scale
        return scale, shift

    sc1, sh1 = bn_fold(params["bn1"])
    sc2, sh2 = bn_fold(params["bn2"], params["b2"])
    sc3, sh3 = bn_fold(params["bn3"], params["b3"])

    def bcast(v):
        return jnp.broadcast_to(v.astype(f32)[:, None], (C_MID, L1))

    # one packed (112, 31) constant: b1 | bn1s | bn1b | bn2s | bn3s | bn2b | bn3b
    vecs = jnp.concatenate(
        [bcast(params["b1"]), bcast(sc1), bcast(sh1),
         bcast(sc2), bcast(sc3), bcast(sh2), bcast(sh3)], axis=0)

    kernel = functools.partial(_block23_kernel, batch=batch)
    out = pl.pallas_call(
        kernel,
        out_shape=jax.ShapeDtypeStruct((n_pad, 3 * C_MID, L_OUT), f32),
        grid=(steps,),
        in_specs=[
            pl.BlockSpec((batch, C_IN, L_IN), lambda g: (g, 0, 0)),      # x block
            pl.BlockSpec((3 * C_MID, C_IN), lambda g: (0, 0)),           # w1_stack
            pl.BlockSpec((K, L_IN, L1), lambda g: (0, 0, 0)),            # s1
            pl.BlockSpec((6 * C_MID, C_MID), lambda g: (0, 0)),          # w23_stack
            pl.BlockSpec((K, L1, L1), lambda g: (0, 0, 0)),              # s2
            pl.BlockSpec((L1, 3 * L_OUT), lambda g: (0, 0)),             # pool_mat
            pl.BlockSpec((7 * C_MID, L1), lambda g: (0, 0)),             # packed vecs
        ],
        out_specs=pl.BlockSpec((batch, 3 * C_MID, L_OUT), lambda g: (g, 0, 0)),
        compiler_params=pltpu.CompilerParams(dimension_semantics=("parallel",)),
    )(x, w1_stack, s1, w23_stack, s2, pool_mat, vecs)
    return out[:n]


def _reference(x, params):
    def conv1d(h, wgt, b, stride, pad):
        o = lax.conv_general_dilated(
            h, wgt, window_strides=(stride,), padding=[(pad, pad)],
            dimension_numbers=("NCH", "OIH", "NCH"),
            precision=lax.Precision.HIGHEST)
        return o + b[None, :, None]

    def bn(h, p):
        g, beta, mean, var = p
        return ((h - mean[None, :, None]) / jnp.sqrt(var[None, :, None] + BN_EPS)
                * g[None, :, None] + beta[None, :, None])

    x1 = bn(jnp.maximum(conv1d(x, params["w1"], params["b1"], 2, 0), 0.0), params["bn1"])
    y = jnp.clip(bn(conv1d(x1, params["w2"], params["b2"], 1, 1), params["bn2"]), 0.0, 6.0)
    z = jax.nn.sigmoid(bn(conv1d(x1, params["w3"], params["b3"], 1, 1), params["bn3"]))
    cat = jnp.concatenate([x1, y, z], axis=1)
    nb, c, ln = cat.shape
    la = (ln // 3) * 3
    avg = jnp.mean(cat[:, :, :la].reshape(nb, c, ln // 3, 3), axis=-1)
    lm = (avg.shape[-1] // 3) * 3
    return jnp.max(avg[:, :, :lm].reshape(nb, c, lm // 3, 3), axis=-1)


if __name__ == "__main__":
    key = jax.random.PRNGKey(0)
    ks = jax.random.split(key, 8)

    def conv_init(k, c_out, c_in, ksz):
        k1, k2 = jax.random.split(k)
        bound = 1.0 / (c_in * ksz) ** 0.5
        wgt = jax.random.uniform(k1, (c_out, c_in, ksz), jnp.float32, -bound, bound)
        b = jax.random.uniform(k2, (c_out,), jnp.float32, -bound, bound)
        return wgt, b

    def bn_init(k, c):
        k1, k2, k3, k4 = jax.random.split(k, 4)
        gamma = jax.random.uniform(k1, (c,), jnp.float32, 0.5, 1.5)
        beta = 0.1 * jax.random.normal(k2, (c,), jnp.float32)
        mean = 0.1 * jax.random.normal(k3, (c,), jnp.float32)
        var = jax.random.uniform(k4, (c,), jnp.float32, 0.5, 1.5)
        return gamma, beta, mean, var

    x = jax.random.normal(ks[0], (2, C_IN, L_IN), jnp.float32)
    w1, b1 = conv_init(ks[1], C_MID, C_IN, K)
    w2, b2 = conv_init(ks[2], C_MID, C_MID, K)
    w3, b3 = conv_init(ks[3], C_MID, C_MID, K)
    params = {
        "w1": w1, "b1": b1, "bn1": bn_init(ks[4], C_MID),
        "w2": w2, "b2": b2, "bn2": bn_init(ks[5], C_MID),
        "w3": w3, "b3": b3, "bn3": bn_init(ks[6], C_MID),
    }

    out = jax.jit(test_block23_forward)(x, params)
    jax.block_until_ready(out)

    ref = _reference(x, params)
    assert out.shape == ref.shape == (2, 3 * C_MID, L_OUT), (out.shape, ref.shape)
    assert out.dtype == ref.dtype
    assert jnp.allclose(out, ref, atol=1e-3, rtol=1e-3), float(jnp.max(jnp.abs(out - ref)))

    print("KERNEL_OK")
</pallas_src>

<mosaic_0001>
module attributes {stable_mosaic.version = 11 : i64} {
  func.func @_block23_kernel(%arg0: i32, %arg1: memref<1x3x64xf32, #tpu.memory_space<vmem>>, %arg2: memref<48x3xf32, #tpu.memory_space<vmem>>, %arg3: memref<3x64x31xf32, #tpu.memory_space<vmem>>, %arg4: memref<96x16xf32, #tpu.memory_space<vmem>>, %arg5: memref<3x31x31xf32, #tpu.memory_space<vmem>>, %arg6: memref<31x9xf32, #tpu.memory_space<vmem>>, %arg7: memref<112x31xf32, #tpu.memory_space<vmem>>, %arg8: memref<1x48x3xf32, #tpu.memory_space<vmem>>) attributes {dimension_semantics = [#tpu.dimension_semantics<parallel>], iteration_bounds = array<i64: 2>, scalar_prefetch = 0 : i64, scratch_operands = 0 : i64, tpu.core_type = #tpu.core_type<tc>, window_params = [{transform_indices = @transform_0, window_bounds = array<i64: 1, 3, 64>}, {pipeline_mode = #tpu.pipeline_mode<synchronous>, transform_indices = @transform_1, window_bounds = array<i64: 48, 3>}, {pipeline_mode = #tpu.pipeline_mode<synchronous>, transform_indices = @transform_2, window_bounds = array<i64: 3, 64, 31>}, {pipeline_mode = #tpu.pipeline_mode<synchronous>, transform_indices = @transform_3, window_bounds = array<i64: 96, 16>}, {pipeline_mode = #tpu.pipeline_mode<synchronous>, transform_indices = @transform_4, window_bounds = array<i64: 3, 31, 31>}, {pipeline_mode = #tpu.pipeline_mode<synchronous>, transform_indices = @transform_5, window_bounds = array<i64: 31, 9>}, {pipeline_mode = #tpu.pipeline_mode<synchronous>, transform_indices = @transform_6, window_bounds = array<i64: 112, 31>}, {transform_indices = @transform_7, window_bounds = array<i64: 1, 48, 3>}]} {
    %c0 = arith.constant 0 : index
    %c0_0 = arith.constant 0 : index
    %0 = vector.load %arg2[%c0, %c0_0] : memref<48x3xf32, #tpu.memory_space<vmem>>, vector<48x3xf32>
    %c0_1 = arith.constant 0 : index
    %c0_2 = arith.constant 0 : index
    %1 = vector.load %arg4[%c0_1, %c0_2] : memref<96x16xf32, #tpu.memory_space<vmem>>, vector<96x16xf32>
    %c0_3 = arith.constant 0 : index
    %c0_4 = arith.constant 0 : index
    %2 = vector.load %arg6[%c0_3, %c0_4] : memref<31x9xf32, #tpu.memory_space<vmem>>, vector<31x9xf32>
    %c0_5 = arith.constant 0 : index
    %c0_6 = arith.constant 0 : index
    %3 = vector.load %arg7[%c0_5, %c0_6] : memref<112x31xf32, #tpu.memory_space<vmem>>, vector<112x31xf32>
    %c0_7 = arith.constant 0 : index
    %c0_8 = arith.constant 0 : index
    %c0_9 = arith.constant 0 : index
    %4 = vector.load %arg3[%c0_7, %c0_8, %c0_9] : memref<3x64x31xf32, #tpu.memory_space<vmem>>, vector<1x64x31xf32>
    %5 = vector.shape_cast %4 : vector<1x64x31xf32> to vector<64x31xf32>
    %c1 = arith.constant 1 : index
    %c0_10 = arith.constant 0 : index
    %c0_11 = arith.constant 0 : index
    %6 = vector.load %arg3[%c1, %c0_10, %c0_11] : memref<3x64x31xf32, #tpu.memory_space<vmem>>, vector<1x64x31xf32>
    %7 = vector.shape_cast %6 : vector<1x64x31xf32> to vector<64x31xf32>
    %c2 = arith.constant 2 : index
    %c0_12 = arith.constant 0 : index
    %c0_13 = arith.constant 0 : index
    %8 = vector.load %arg3[%c2, %c0_12, %c0_13] : memref<3x64x31xf32, #tpu.memory_space<vmem>>, vector<1x64x31xf32>
    %9 = vector.shape_cast %8 : vector<1x64x31xf32> to vector<64x31xf32>
    %c0_14 = arith.constant 0 : index
    %c0_15 = arith.constant 0 : index
    %c0_16 = arith.constant 0 : index
    %10 = vector.load %arg5[%c0_14, %c0_15, %c0_16] : memref<3x31x31xf32, #tpu.memory_space<vmem>>, vector<1x31x31xf32>
    %11 = vector.shape_cast %10 : vector<1x31x31xf32> to vector<31x31xf32>
    %c1_17 = arith.constant 1 : index
    %c0_18 = arith.constant 0 : index
    %c0_19 = arith.constant 0 : index
    %12 = vector.load %arg5[%c1_17, %c0_18, %c0_19] : memref<3x31x31xf32, #tpu.memory_space<vmem>>, vector<1x31x31xf32>
    %13 = vector.shape_cast %12 : vector<1x31x31xf32> to vector<31x31xf32>
    %c2_20 = arith.constant 2 : index
    %c0_21 = arith.constant 0 : index
    %c0_22 = arith.constant 0 : index
    %14 = vector.load %arg5[%c2_20, %c0_21, %c0_22] : memref<3x31x31xf32, #tpu.memory_space<vmem>>, vector<1x31x31xf32>
    %15 = vector.shape_cast %14 : vector<1x31x31xf32> to vector<31x31xf32>
    %16 = vector.extract_strided_slice %3 {offsets = [0, 0], sizes = [16, 31], strides = [1, 1]} : vector<112x31xf32> to vector<16x31xf32>
    %17 = vector.extract_strided_slice %3 {offsets = [16, 0], sizes = [16, 31], strides = [1, 1]} : vector<112x31xf32> to vector<16x31xf32>
    %18 = vector.extract_strided_slice %3 {offsets = [32, 0], sizes = [16, 31], strides = [1, 1]} : vector<112x31xf32> to vector<16x31xf32>
    %19 = vector.extract_strided_slice %3 {offsets = [48, 0], sizes = [32, 31], strides = [1, 1]} : vector<112x31xf32> to vector<32x31xf32>
    %20 = vector.extract_strided_slice %3 {offsets = [80, 0], sizes = [32, 31], strides = [1, 1]} : vector<112x31xf32> to vector<32x31xf32>
    %c0_23 = arith.constant 0 : index
    %c0_24 = arith.constant 0 : index
    %c0_25 = arith.constant 0 : index
    %21 = vector.load %arg1[%c0_23, %c0_24, %c0_25] : memref<1x3x64xf32, #tpu.memory_space<vmem>>, vector<1x3x64xf32>
    %22 = vector.shape_cast %21 : vector<1x3x64xf32> to vector<3x64xf32>
    %cst = arith.constant dense<0.000000e+00> : vector<48x64xf32>
    %23 = tpu.matmul %0, %22, %cst {dimension_numbers = #tpu.dot_dimension_numbers<[1], [0], [0], [1], [0, 0, 1, 1], [], []>} : vector<48x3xf32>, vector<3x64xf32>, vector<48x64xf32> -> vector<48x64xf32>
    %24 = vector.extract_strided_slice %23 {offsets = [0, 0], sizes = [16, 64], strides = [1, 1]} : vector<48x64xf32> to vector<16x64xf32>
    %cst_26 = arith.constant dense<0.000000e+00> : vector<16x31xf32>
    %25 = tpu.matmul %24, %5, %cst_26 {dimension_numbers = #tpu.dot_dimension_numbers<[1], [0], [0], [1], [0, 0, 1, 1], [], []>} : vector<16x64xf32>, vector<64x31xf32>, vector<16x31xf32> -> vector<16x31xf32>
    %26 = vector.extract_strided_slice %23 {offsets = [16, 0], sizes = [16, 64], strides = [1, 1]} : vector<48x64xf32> to vector<16x64xf32>
    %cst_27 = arith.constant dense<0.000000e+00> : vector<16x31xf32>
    %27 = tpu.matmul %26, %7, %cst_27 {dimension_numbers = #tpu.dot_dimension_numbers<[1], [0], [0], [1], [0, 0, 1, 1], [], []>} : vector<16x64xf32>, vector<64x31xf32>, vector<16x31xf32> -> vector<16x31xf32>
    %28 = arith.addf %25, %27 : vector<16x31xf32>
    %29 = vector.extract_strided_slice %23 {offsets = [32, 0], sizes = [16, 64], strides = [1, 1]} : vector<48x64xf32> to vector<16x64xf32>
    %cst_28 = arith.constant dense<0.000000e+00> : vector<16x31xf32>
    %30 = tpu.matmul %29, %9, %cst_28 {dimension_numbers = #tpu.dot_dimension_numbers<[1], [0], [0], [1], [0, 0, 1, 1], [], []>} : vector<16x64xf32>, vector<64x31xf32>, vector<16x31xf32> -> vector<16x31xf32>
    %31 = arith.addf %28, %30 : vector<16x31xf32>
    %32 = arith.addf %31, %16 : vector<16x31xf32>
    %cst_29 = arith.constant 0.000000e+00 : f32
    %33 = vector.broadcast %cst_29 : f32 to vector<16x31xf32>
    %34 = arith.maximumf %32, %33 : vector<16x31xf32>
    %35 = arith.mulf %34, %17 : vector<16x31xf32>
    %36 = arith.addf %35, %18 : vector<16x31xf32>
    %cst_30 = arith.constant dense<0.000000e+00> : vector<96x31xf32>
    %37 = tpu.matmul %1, %36, %cst_30 {dimension_numbers = #tpu.dot_dimension_numbers<[1], [0], [0], [1], [0, 0, 1, 1], [], []>} : vector<96x16xf32>, vector<16x31xf32>, vector<96x31xf32> -> vector<96x31xf32>
    %38 = vector.extract_strided_slice %37 {offsets = [0, 0], sizes = [32, 31], strides = [1, 1]} : vector<96x31xf32> to vector<32x31xf32>
    %cst_31 = arith.constant dense<0.000000e+00> : vector<32x31xf32>
    %39 = tpu.matmul %38, %11, %cst_31 {dimension_numbers = #tpu.dot_dimension_numbers<[1], [0], [0], [1], [0, 0, 1, 1], [], []>} : vector<32x31xf32>, vector<31x31xf32>, vector<32x31xf32> -> vector<32x31xf32>
    %40 = vector.extract_strided_slice %37 {offsets = [32, 0], sizes = [32, 31], strides = [1, 1]} : vector<96x31xf32> to vector<32x31xf32>
    %cst_32 = arith.constant dense<0.000000e+00> : vector<32x31xf32>
    %41 = tpu.matmul %40, %13, %cst_32 {dimension_numbers = #tpu.dot_dimension_numbers<[1], [0], [0], [1], [0, 0, 1, 1], [], []>} : vector<32x31xf32>, vector<31x31xf32>, vector<32x31xf32> -> vector<32x31xf32>
    %42 = arith.addf %39, %41 : vector<32x31xf32>
    %43 = vector.extract_strided_slice %37 {offsets = [64, 0], sizes = [32, 31], strides = [1, 1]} : vector<96x31xf32> to vector<32x31xf32>
    %cst_33 = arith.constant dense<0.000000e+00> : vector<32x31xf32>
    %44 = tpu.matmul %43, %15, %cst_33 {dimension_numbers = #tpu.dot_dimension_numbers<[1], [0], [0], [1], [0, 0, 1, 1], [], []>} : vector<32x31xf32>, vector<31x31xf32>, vector<32x31xf32> -> vector<32x31xf32>
    %45 = arith.addf %42, %44 : vector<32x31xf32>
    %46 = arith.mulf %45, %19 : vector<32x31xf32>
    %47 = arith.addf %46, %20 : vector<32x31xf32>
    %48 = vector.extract_strided_slice %47 {offsets = [0, 0], sizes = [16, 31], strides = [1, 1]} : vector<32x31xf32> to vector<16x31xf32>
    %cst_34 = arith.constant 0.000000e+00 : f32
    %cst_35 = arith.constant 6.000000e+00 : f32
    %49 = vector.broadcast %cst_34 : f32 to vector<16x31xf32>
    %50 = arith.maximumf %49, %48 : vector<16x31xf32>
    %51 = vector.broadcast %cst_35 : f32 to vector<16x31xf32>
    %52 = arith.minimumf %51, %50 : vector<16x31xf32>
    %53 = vector.extract_strided_slice %47 {offsets = [16, 0], sizes = [16, 31], strides = [1, 1]} : vector<32x31xf32> to vector<16x31xf32>
    %cst_36 = arith.constant 0.000000e+00 : f32
    %54 = vector.broadcast %cst_36 : f32 to vector<16x31xf32>
    %55 = arith.subf %54, %53 : vector<16x31xf32>
    %56 = math.exp %55 : vector<16x31xf32>
    %cst_37 = arith.constant 1.000000e+00 : f32
    %57 = vector.broadcast %cst_37 : f32 to vector<16x31xf32>
    %58 = arith.addf %57, %56 : vector<16x31xf32>
    %59 = tpu.reciprocal %58 {approx = true} : vector<16x31xf32> -> vector<16x31xf32>
    %60 = tpu.concatenate %36, %52, %59 in 0 : vector<16x31xf32>, vector<16x31xf32>, vector<16x31xf32> -> vector<48x31xf32>
    %cst_38 = arith.constant dense<0.000000e+00> : vector<48x9xf32>
    %61 = tpu.matmul %60, %2, %cst_38 {dimension_numbers = #tpu.dot_dimension_numbers<[1], [0], [0], [1], [0, 0, 1, 1], [], []>} : vector<48x31xf32>, vector<31x9xf32>, vector<48x9xf32> -> vector<48x9xf32>
    %62 = vector.extract_strided_slice %61 {offsets = [0, 0], sizes = [48, 3], strides = [1, 1]} : vector<48x9xf32> to vector<48x3xf32>
    %63 = vector.extract_strided_slice %61 {offsets = [0, 3], sizes = [48, 3], strides = [1, 1]} : vector<48x9xf32> to vector<48x3xf32>
    %64 = arith.maximumf %62, %63 : vector<48x3xf32>
    %65 = vector.extract_strided_slice %61 {offsets = [0, 6], sizes = [48, 3], strides = [1, 1]} : vector<48x9xf32> to vector<48x3xf32>
    %66 = arith.maximumf %64, %65 : vector<48x3xf32>
    %c0_39 = arith.constant 0 : index
    %c0_40 = arith.constant 0 : index
    %c0_41 = arith.constant 0 : index
    %67 = vector.load %arg8[%c0_39, %c0_40, %c0_41] : memref<1x48x3xf32, #tpu.memory_space<vmem>>, vector<1x48x3xf32>
    %68 = vector.shape_cast %67 : vector<1x48x3xf32> to vector<48x3xf32>
    %69 = vector.shape_cast %66 : vector<48x3xf32> to vector<1x48x3xf32>
    tpu.vector_store %arg8[%c0_39, %c0_40, %c0_41], %69 {strides = array<i32>} : memref<1x48x3xf32, #tpu.memory_space<vmem>>, vector<1x48x3xf32>,
    return
  }
  func.func @transform_0(%arg0: i32) -> (i32, i32, i32) {
    %c0_i32 = arith.constant 0 : i32
    %c0_i32_0 = arith.constant 0 : i32
    %c0_i32_1 = arith.constant 0 : i32
    return %arg0, %c0_i32, %c0_i32_0 : i32, i32, i32
  }
  func.func @transform_1(%arg0: i32) -> (i32, i32) {
    %c0_i32 = arith.constant 0 : i32
    %c0_i32_0 = arith.constant 0 : i32
    %c0_i32_1 = arith.constant 0 : i32
    return %c0_i32, %c0_i32_0 : i32, i32
  }
  func.func @transform_2(%arg0: i32) -> (i32, i32, i32) {
    %c0_i32 = arith.constant 0 : i32
    %c0_i32_0 = arith.constant 0 : i32
    %c0_i32_1 = arith.constant 0 : i32
    %c0_i32_2 = arith.constant 0 : i32
    return %c0_i32, %c0_i32_0, %c0_i32_1 : i32, i32, i32
  }
  func.func @transform_3(%arg0: i32) -> (i32, i32) {
    %c0_i32 = arith.constant 0 : i32
    %c0_i32_0 = arith.constant 0 : i32
    %c0_i32_1 = arith.constant 0 : i32
    return %c0_i32, %c0_i32_0 : i32, i32
  }
  func.func @transform_4(%arg0: i32) -> (i32, i32, i32) {
    %c0_i32 = arith.constant 0 : i32
    %c0_i32_0 = arith.constant 0 : i32
    %c0_i32_1 = arith.constant 0 : i32
    %c0_i32_2 = arith.constant 0 : i32
    return %c0_i32, %c0_i32_0, %c0_i32_1 : i32, i32, i32
  }
  func.func @transform_5(%arg0: i32) -> (i32, i32) {
    %c0_i32 = arith.constant 0 : i32
    %c0_i32_0 = arith.constant 0 : i32
    %c0_i32_1 = arith.constant 0 : i32
    return %c0_i32, %c0_i32_0 : i32, i32
  }
  func.func @transform_6(%arg0: i32) -> (i32, i32) {
    %c0_i32 = arith.constant 0 : i32
    %c0_i32_0 = arith.constant 0 : i32
    %c0_i32_1 = arith.constant 0 : i32
    return %c0_i32, %c0_i32_0 : i32, i32
  }
  func.func @transform_7(%arg0: i32) -> (i32, i32, i32) {
    %c0_i32 = arith.constant 0 : i32
    %c0_i32_0 = arith.constant 0 : i32
    %c0_i32_1 = arith.constant 0 : i32
    return %arg0, %c0_i32, %c0_i32_0 : i32, i32, i32
  }
}

</mosaic_0001>

<llo_original>
// kernel: test_block23_forward.1
$region0: #{test_block23_forward.1}
  #allocation0 [shape = 'u32[]', space=smem, size = 0x4, offset = 0x4, fixed_abs, tag = 'smem constant byte address 0x4 - core index']
  #allocation1 [shape = 'u32[144,128]{1,0:T(1,128)}', space=vmem, size = 0x12000, scoped, tag = 'internal scratch']
  %s0 = inlined_call_operand.vmem [shape: f32[2,3,64], index: 0, kind: input, shape index: {}]
  %s1 = inlined_call_operand.vmem [shape: f32[48,3], index: 1, kind: input, shape index: {}]
  %s2 = inlined_call_operand.vmem [shape: f32[3,64,31], index: 2, kind: input, shape index: {}]
  %s3 = inlined_call_operand.vmem [shape: f32[96,16], index: 3, kind: input, shape index: {}]
  %s4 = inlined_call_operand.vmem [shape: f32[3,31,31], index: 4, kind: input, shape index: {}]
  %s5 = inlined_call_operand.vmem [shape: f32[31,9], index: 5, kind: input, shape index: {}]
  %s6 = inlined_call_operand.vmem [shape: f32[112,31], index: 6, kind: input, shape index: {}]
  %s7 = inlined_call_operand.vmem [shape: f32[2,48,3], index: 7, kind: output, shape index: {}]
  %s8 = sld [smem:[#allocation0]]
  $region61: #{test_block23_forward.1} parent=0
    _
  %s10 = ssub.s32 1, %s8
  %s11 = scalar_select 0, %s10, %s8
  loop: start=0, step=1, limit=4
  $region2: #{test_block23_forward.1} parent=0 // loop_pre_header
    _
  $region3: #{test_block23_forward.1} parent=0 // loop_header
    %s13 = sphi 0, %s17
    %p14 = scmp.ge.s32.totalorder %s13, 4
    %s23 = sphi 0, %s25
    %s26 = sphi 0, %s23
    %s27 = sphi 0, %s26
    %s43 = sphi 0, %s27
    %s47 = sphi 0, %s47
    %s49 = sphi 0, %s47
    %s50 = sphi 0, %s49
    %s64 = sphi 0, %s50
    %s68 = sphi 0, %s68
    %s70 = sphi 0, %s68
    %s71 = sphi 0, %s70
    %s85 = sphi 0, %s71
    %s89 = sphi 0, %s89
    %s91 = sphi 0, %s89
    %s92 = sphi 0, %s91
    %s106 = sphi 0, %s92
    %s110 = sphi 0, %s110
    %s112 = sphi 0, %s110
    %s113 = sphi 0, %s112
    %s127 = sphi 0, %s113
    %s131 = sphi 0, %s131
    %s133 = sphi 0, %s131
    %s134 = sphi 0, %s133
    %s148 = sphi 0, %s134
    %s152 = sphi 0, %s152
    %s154 = sphi 0, %s152
    %s155 = sphi 0, %s154
    %s169 = sphi 0, %s155
    %s175 = sphi 0, %s177
    %s178 = sphi 0, %s175
    %s179 = sphi 0, %s178
    %s195 = sphi 0, %s179
  $region4: #{test_block23_forward.1} parent=0 // loop_header_branch
    %16 = sbr.rel (%p14) target = $region8
  $region5: #{test_block23_forward.1} parent=0 // loop_body
    %s18 = ssub.s32 %s13, 1
    %s19 = ssub.s32 %s13, 2
    %s20 = sadd.s32 %s13, 1
    %s21 = ssub.s32 %s13, %s20
    %p22 = scmp.eq.s32.totalorder %s21, 0
    %s24 = sadd.s32 %s23, 1
    %s25 = scalar_select %p22, %s23, %s24
    %p28 = pneg %p22
    %p29 = scmp.eq.s32.totalorder %s13, 1
    %p30 = por %p28, %p29
    %p31 = scmp.ne.s32.totalorder %s23, %s26
    %p32 = scmp.eq.s32.totalorder %s13, 0
    %p33 = por %p31, %p32
    %p34 = scmp.ne.s32.totalorder %s23, %s26
    %p35 = scmp.eq.s32.totalorder %s18, 1
    %p36 = por %p34, %p35
    %p37 = scmp.ne.s32.totalorder %s26, %s27
    %p38 = scmp.eq.s32.totalorder %s18, 0
    %p39 = por %p37, %p38
    %p40 = scmp.ne.s32.totalorder %s26, %s27
    %p41 = scmp.eq.s32.totalorder %s19, 1
    %p42 = por %p40, %p41
    %p44 = scmp.ne.s32.totalorder %s27, %s43
    %p45 = scmp.eq.s32.totalorder %s19, 0
    %p46 = por %p44, %p45
    %s48 = sadd.s32 %s47, 1
    %p51 = scmp.eq.s32.totalorder %s13, 1
    %p52 = scmp.ne.s32.totalorder %s47, %s49
    %p53 = scmp.eq.s32.totalorder %s13, 0
    %p54 = por %p52, %p53
    %p55 = scmp.ne.s32.totalorder %s47, %s49
    %p56 = scmp.eq.s32.totalorder %s18, 1
    %p57 = por %p55, %p56
    %p58 = scmp.ne.s32.totalorder %s49, %s50
    %p59 = scmp.eq.s32.totalorder %s18, 0
    %p60 = por %p58, %p59
    %p61 = scmp.ne.s32.totalorder %s49, %s50
    %p62 = scmp.eq.s32.totalorder %s19, 1
    %p63 = por %p61, %p62
    %p65 = scmp.ne.s32.totalorder %s50, %s64
    %p66 = scmp.eq.s32.totalorder %s19, 0
    %p67 = por %p65, %p66
    %s69 = sadd.s32 %s68, 1
    %p72 = scmp.eq.s32.totalorder %s13, 1
    %p73 = scmp.ne.s32.totalorder %s68, %s70
    %p74 = scmp.eq.s32.totalorder %s13, 0
    %p75 = por %p73, %p74
    %p76 = scmp.ne.s32.totalorder %s68, %s70
    %p77 = scmp.eq.s32.totalorder %s18, 1
    %p78 = por %p76, %p77
    %p79 = scmp.ne.s32.totalorder %s70, %s71
    %p80 = scmp.eq.s32.totalorder %s18, 0
    %p81 = por %p79, %p80
    %p82 = scmp.ne.s32.totalorder %s70, %s71
    %p83 = scmp.eq.s32.totalorder %s19, 1
    %p84 = por %p82, %p83
    %p86 = scmp.ne.s32.totalorder %s71, %s85
    %p87 = scmp.eq.s32.totalorder %s19, 0
    %p88 = por %p86, %p87
    %s90 = sadd.s32 %s89, 1
    %p93 = scmp.eq.s32.totalorder %s13, 1
    %p94 = scmp.ne.s32.totalorder %s89, %s91
    %p95 = scmp.eq.s32.totalorder %s13, 0
    %p96 = por %p94, %p95
    %p97 = scmp.ne.s32.totalorder %s89, %s91
    %p98 = scmp.eq.s32.totalorder %s18, 1
    %p99 = por %p97, %p98
    %p100 = scmp.ne.s32.totalorder %s91, %s92
    %p101 = scmp.eq.s32.totalorder %s18, 0
    %p102 = por %p100, %p101
    %p103 = scmp.ne.s32.totalorder %s91, %s92
    %p104 = scmp.eq.s32.totalorder %s19, 1
    %p105 = por %p103, %p104
    %p107 = scmp.ne.s32.totalorder %s92, %s106
    %p108 = scmp.eq.s32.totalorder %s19, 0
    %p109 = por %p107, %p108
    %s111 = sadd.s32 %s110, 1
    %p114 = scmp.eq.s32.totalorder %s13, 1
    %p115 = scmp.ne.s32.totalorder %s110, %s112
    %p116 = scmp.eq.s32.totalorder %s13, 0
    %p117 = por %p115, %p116
    %p118 = scmp.ne.s32.totalorder %s110, %s112
    %p119 = scmp.eq.s32.totalorder %s18, 1
    %p120 = por %p118, %p119
    %p121 = scmp.ne.s32.totalorder %s112, %s113
    %p122 = scmp.eq.s32.totalorder %s18, 0
    %p123 = por %p121, %p122
    %p124 = scmp.ne.s32.totalorder %s112, %s113
    %p125 = scmp.eq.s32.totalorder %s19, 1
    %p126 = por %p124, %p125
    %p128 = scmp.ne.s32.totalorder %s113, %s127
    %p129 = scmp.eq.s32.totalorder %s19, 0
    %p130 = por %p128, %p129
    %s132 = sadd.s32 %s131, 1
    %p135 = scmp.eq.s32.totalorder %s13, 1
    %p136 = scmp.ne.s32.totalorder %s131, %s133
    %p137 = scmp.eq.s32.totalorder %s13, 0
    %p138 = por %p136, %p137
    %p139 = scmp.ne.s32.totalorder %s131, %s133
    %p140 = scmp.eq.s32.totalorder %s18, 1
    %p141 = por %p139, %p140
    %p142 = scmp.ne.s32.totalorder %s133, %s134
    %p143 = scmp.eq.s32.totalorder %s18, 0
    %p144 = por %p142, %p143
    %p145 = scmp.ne.s32.totalorder %s133, %s134
    %p146 = scmp.eq.s32.totalorder %s19, 1
    %p147 = por %p145, %p146
    %p149 = scmp.ne.s32.totalorder %s134, %s148
    %p150 = scmp.eq.s32.totalorder %s19, 0
    %p151 = por %p149, %p150
    %s153 = sadd.s32 %s152, 1
    %p156 = scmp.eq.s32.totalorder %s13, 1
    %p157 = scmp.ne.s32.totalorder %s152, %s154
    %p158 = scmp.eq.s32.totalorder %s13, 0
    %p159 = por %p157, %p158
    %p160 = scmp.ne.s32.totalorder %s152, %s154
    %p161 = scmp.eq.s32.totalorder %s18, 1
    %p162 = por %p160, %p161
    %p163 = scmp.ne.s32.totalorder %s154, %s155
    %p164 = scmp.eq.s32.totalorder %s18, 0
    %p165 = por %p163, %p164
    %p166 = scmp.ne.s32.totalorder %s154, %s155
    %p167 = scmp.eq.s32.totalorder %s19, 1
    %p168 = por %p166, %p167
    %p170 = scmp.ne.s32.totalorder %s155, %s169
    %p171 = scmp.eq.s32.totalorder %s19, 0
    %p172 = por %p170, %p171
    %s173 = ssub.s32 %s13, %s20
    %p174 = scmp.eq.s32.totalorder %s173, 0
    %s176 = sadd.s32 %s175, 1
    %s177 = scalar_select %p174, %s175, %s176
    %p180 = pneg %p174
    %p181 = scmp.eq.s32.totalorder %s13, 1
    %p182 = por %p180, %p181
    %p183 = scmp.ne.s32.totalorder %s175, %s178
    %p184 = scmp.eq.s32.totalorder %s13, 0
    %p185 = por %p183, %p184
    %p186 = scmp.ne.s32.totalorder %s175, %s178
    %p187 = scmp.eq.s32.totalorder %s18, 1
    %p188 = por %p186, %p187
    %p189 = scmp.ne.s32.totalorder %s178, %s179
    %p190 = scmp.eq.s32.totalorder %s18, 0
    %p191 = por %p189, %p190
    %p192 = scmp.ne.s32.totalorder %s178, %s179
    %p193 = scmp.eq.s32.totalorder %s19, 1
    %p194 = por %p192, %p193
    %p196 = scmp.ne.s32.totalorder %s179, %s195
    %p197 = scmp.eq.s32.totalorder %s19, 0
    %p198 = por %p196, %p197
    %p199 = scmp.le.s32.totalorder 1, %s13
    %p200 = scmp.lt.s32.totalorder %s13, 3
    %p201 = pnand %p199, %p200
    %p202 = pneg %p201
    // Predicated region
    $region9: #{test_block23_forward.1} parent=5 // pred_check
      _
    $region10: #{test_block23_forward.1} parent=5 // pred_check_branch
      %204 = sbr.rel (%p201) target = $region12
    $region11: #{test_block23_forward.1} parent=5 // pred_region
      %s205 = ssub.s32 %s13, 1
      // Predicated region
      $region13: #{test_block23_forward.1} parent=11 // pred_check
        %p206 = pneg %p60
      $region14: #{test_block23_forward.1} parent=11 // pred_check_branch
        %208 = sbr.rel (%p206) target = $region16
      $region15: #{test_block23_forward.1} parent=11 // pred_region
        _
      $region16: #{test_block23_forward.1} parent=11 // pred_fallthru
        _
      // Predicated region
      $region17: #{test_block23_forward.1} parent=11 // pred_check
        %p209 = pneg %p81
      $region18: #{test_block23_forward.1} parent=11 // pred_check_branch
        %211 = sbr.rel (%p209) target = $region20
      $region19: #{test_block23_forward.1} parent=11 // pred_region
        _
      $region20: #{test_block23_forward.1} parent=11 // pred_fallthru
        _
      // Predicated region
      $region21: #{test_block23_forward.1} parent=11 // pred_check
        %p212 = pneg %p102
      $region22: #{test_block23_forward.1} parent=11 // pred_check_branch
        %214 = sbr.rel (%p212) target = $region24
      $region23: #{test_block23_forward.1} parent=11 // pred_region
        _
      $region24: #{test_block23_forward.1} parent=11 // pred_fallthru
        _
      // Predicated region
      $region25: #{test_block23_forward.1} parent=11 // pred_check
        %p215 = pneg %p123
      $region26: #{test_block23_forward.1} parent=11 // pred_check_branch
        %217 = sbr.rel (%p215) target = $region28
      $region27: #{test_block23_forward.1} parent=11 // pred_region
        _
      $region28: #{test_block23_forward.1} parent=11 // pred_fallthru
        _
      // Predicated region
      $region29: #{test_block23_forward.1} parent=11 // pred_check
        %p218 = pneg %p144
      $region30: #{test_block23_forward.1} parent=11 // pred_check_branch
        %220 = sbr.rel (%p218) target = $region32
      $region31: #{test_block23_forward.1} parent=11 // pred_region
        _
      $region32: #{test_block23_forward.1} parent=11 // pred_fallthru
        _
      // Predicated region
      $region33: #{test_block23_forward.1} parent=11 // pred_check
        %p221 = pneg %p165
      $region34: #{test_block23_forward.1} parent=11 // pred_check_branch
        %223 = sbr.rel (%p221) target = $region36
      $region35: #{test_block23_forward.1} parent=11 // pred_region
        _
      $region36: #{test_block23_forward.1} parent=11 // pred_fallthru
        _
    $region12: #{test_block23_forward.1} parent=5 // pred_fallthru
      _
    %p224 = scmp.lt.s32.totalorder %s13, 2
    // Predicated region
    $region37: #{test_block23_forward.1} parent=5 // pred_check
      %p225 = pneg %p224
    $region38: #{test_block23_forward.1} parent=5 // pred_check_branch
      %227 = sbr.rel (%p225) target = $region40
    $region39: #{test_block23_forward.1} parent=5 // pred_region
      // Predicated region
      $region41: #{test_block23_forward.1} parent=39 // pred_check
        %p228 = pneg %p33
      $region42: #{test_block23_forward.1} parent=39 // pred_check_branch
        %230 = sbr.rel (%p228) target = $region44
      $region43: #{test_block23_forward.1} parent=39 // pred_region
        %p231 = scmp.lt.s32.totalorder %s13, 1
        %s232 = scalar_select %p231, %s13, 1
        %s233 = smul.addr %s232, 4
        %s234 = scalar_lea.vmem %s0, %s233
      $region44: #{test_block23_forward.1} parent=39 // pred_fallthru
        _
    $region40: #{test_block23_forward.1} parent=5 // pred_fallthru
      _
    %p235 = scmp.le.s32.totalorder 1, %s13
    %p236 = scmp.lt.s32.totalorder %s13, 3
    %p237 = pnand %p235, %p236
    %p238 = pneg %p237
    // Predicated region
    $region45: #{test_block23_forward.1} parent=5 // pred_check
      _
    $region46: #{test_block23_forward.1} parent=5 // pred_check_branch
      %240 = sbr.rel (%p237) target = $region48
    $region47: #{test_block23_forward.1} parent=5 // pred_region
      %s241 = ssub.s32 %s13, 1
      %p242 = scmp.lt.s32.totalorder %s18, 1
      %s243 = scalar_select %p242, %s18, 1
      %s244 = smul.addr %s243, 4
      %s245 = scalar_lea.vmem %s0, %s244
      %p246 = pneg %p39
      %p247 = pneg %p36
      %p248 = pneg %p60
      %p249 = pneg %p57
      %p250 = pneg %p81
      %p251 = pneg %p78
      %p252 = pneg %p102
      %p253 = pneg %p99
      %p254 = pneg %p123
      %p255 = pneg %p120
      %p256 = pneg %p144
      %p257 = pneg %p141
      %p258 = pneg %p165
      %p259 = pneg %p162
      %p260 = pneg %p191
      %p261 = pneg %p188
      %p262 = scmp.lt.s32.totalorder %s18, 1
      %s263 = scalar_select %p262, %s18, 1
      %s264 = smul.addr %s263, 6
      %s265 = smul.addr %s264, 8
      %s266 = scalar_lea.vmem %s7, %s265
      %p267 = scmp.lt.s32.totalorder %s18, 1
      %s268 = scalar_select %p267, %s18, 1
      %s269 = smul.addr %s268, 4
      %s270 = scalar_lea.vmem %s0, %s269
      %p271 = scmp.lt.s32.totalorder %s18, 1
      %s272 = scalar_select %p271, %s18, 1
      %s273 = smul.addr %s272, 6
      %s274 = smul.addr %s273, 8
      %s275 = scalar_lea.vmem %s7, %s274
      %v276 = vld [vmem:[%s1] sm:$0xff]
      %v277 = vld [vmem:[%s1 + $0x8] sm:$0xff]
      %v278 = vld [vmem:[%s1 + $0x10] sm:$0xff]
      %v279 = vld [vmem:[%s1 + $0x18] sm:$0xff]
      %v280 = vld [vmem:[%s1 + $0x20] sm:$0xff]
      %v281 = vld [vmem:[%s1 + $0x28] sm:$0xff]
      %v282 = vld [vmem:[%s3] sm:$0xff]
      %v283 = vld [vmem:[%s3 + $0x8] sm:$0xff]
      %v284 = vld [vmem:[%s3 + $0x10] sm:$0xff]
      %v285 = vld [vmem:[%s3 + $0x18] sm:$0xff]
      %v286 = vld [vmem:[%s3 + $0x20] sm:$0xff]
      %v287 = vld [vmem:[%s3 + $0x28] sm:$0xff]
      %v288 = vld [vmem:[%s3 + $0x30] sm:$0xff]
      %v289 = vld [vmem:[%s3 + $0x38] sm:$0xff]
      %v290 = vld [vmem:[%s3 + $0x40] sm:$0xff]
      %v291 = vld [vmem:[%s3 + $0x48] sm:$0xff]
      %v292 = vld [vmem:[%s3 + $0x50] sm:$0xff]
      %v293 = vld [vmem:[%s3 + $0x58] sm:$0xff]
      %v294 = vld [vmem:[%s5] sm:$0xff]
      %v295 = vld [vmem:[%s5 + $0x8] sm:$0xff]
      %v296 = vld [vmem:[%s5 + $0x10] sm:$0xff]
      %v297 = vld [vmem:[%s5 + $0x18] sm:$0x7f]
      %v298 = vld [vmem:[%s6] sm:$0xff]
      %v299 = vld [vmem:[%s6 + $0x8] sm:$0xff]
      %v300 = vld [vmem:[%s6 + $0x10] sm:$0xff]
      %v301 = vld [vmem:[%s6 + $0x18] sm:$0xff]
      %v302 = vld [vmem:[%s6 + $0x20] sm:$0xff]
      %v303 = vld [vmem:[%s6 + $0x28] sm:$0xff]
      %v304 = vld [vmem:[%s6 + $0x30] sm:$0xff]
      %v305 = vld [vmem:[%s6 + $0x38] sm:$0xff]
      %v306 = vld [vmem:[%s6 + $0x40] sm:$0xff]
      %v307 = vld [vmem:[%s6 + $0x48] sm:$0xff]
      %v308 = vld [vmem:[%s6 + $0x50] sm:$0xff]
      %v309 = vld [vmem:[%s6 + $0x58] sm:$0xff]
      %v310 = vld [vmem:[%s6 + $0x60] sm:$0xff]
      %v311 = vld [vmem:[%s6 + $0x68] sm:$0xff]
      %v312 = vld [vmem:[%s2] sm:$0xff]
      %v313 = vld [vmem:[%s2 + $0x8] sm:$0xff]
      %v314 = vld [vmem:[%s2 + $0x10] sm:$0xff]
      %v315 = vld [vmem:[%s2 + $0x18] sm:$0xff]
      %v316 = vld [vmem:[%s2 + $0x20] sm:$0xff]
      %v317 = vld [vmem:[%s2 + $0x28] sm:$0xff]
      %v318 = vld [vmem:[%s2 + $0x30] sm:$0xff]
      %v319 = vld [vmem:[%s2 + $0x38] sm:$0xff]
      %s320 = scalar_lea.vmem %s2, 64
      %v321 = vld [vmem:[%s320] sm:$0xff]
      %v322 = vld [vmem:[%s320 + $0x8] sm:$0xff]
      %v323 = vld [vmem:[%s320 + $0x10] sm:$0xff]
      %v324 = vld [vmem:[%s320 + $0x18] sm:$0xff]
      %v325 = vld [vmem:[%s320 + $0x20] sm:$0xff]
      %v326 = vld [vmem:[%s320 + $0x28] sm:$0xff]
      %v327 = vld [vmem:[%s320 + $0x30] sm:$0xff]
      %v328 = vld [vmem:[%s320 + $0x38] sm:$0xff]
      %s329 = scalar_lea.vmem %s2, 128
      %v330 = vld [vmem:[%s329] sm:$0xff]
      %v331 = vld [vmem:[%s329 + $0x8] sm:$0xff]
      %v332 = vld [vmem:[%s329 + $0x10] sm:$0xff]
      %v333 = vld [vmem:[%s329 + $0x18] sm:$0xff]
      %v334 = vld [vmem:[%s329 + $0x20] sm:$0xff]
      %v335 = vld [vmem:[%s329 + $0x28] sm:$0xff]
      %v336 = vld [vmem:[%s329 + $0x30] sm:$0xff]
      %v337 = vld [vmem:[%s329 + $0x38] sm:$0xff]
      %v338 = vld [vmem:[%s4] sm:$0xff]
      %v339 = vld [vmem:[%s4 + $0x8] sm:$0xff]
      %v340 = vld [vmem:[%s4 + $0x10] sm:$0xff]
      %v341 = vld [vmem:[%s4 + $0x18] sm:$0x7f]
      %s342 = scalar_lea.vmem %s4, 32
      %v343 = vld [vmem:[%s342] sm:$0xff]
      %v344 = vld [vmem:[%s342 + $0x8] sm:$0xff]
      %v345 = vld [vmem:[%s342 + $0x10] sm:$0xff]
      %v346 = vld [vmem:[%s342 + $0x18] sm:$0x7f]
      %s347 = scalar_lea.vmem %s4, 64
      %v348 = vld [vmem:[%s347] sm:$0xff]
      %v349 = vld [vmem:[%s347 + $0x8] sm:$0xff]
      %v350 = vld [vmem:[%s347 + $0x10] sm:$0xff]
      %v351 = vld [vmem:[%s347 + $0x18] sm:$0x7f]
      %v352 = vld [vmem:[%s270] sm:$0x7]
      %vm353 = vcmask 23552
      %v355 = vsel %vm353, %v276, 0
      %v358 = vsel %vm353, %v277, 0
      %v361 = vsel %vm353, %v278, 0
      %v364 = vsel %vm353, %v279, 0
      %v367 = vsel %vm353, %v280, 0
      %v370 = vsel %vm353, %v281, 0
      %vm372 = vcmask 1042432
      %v374 = vsel %vm372, %v352, 0
      %376 = vmatprep.subr.mxu0 0.0
      %377 = vmatpush1.msra.mxu0 %v374
      %378 = vmatprep.subr.mxu0 0.0
      %379 = vmatpush1.msra.mxu0 0.0
      %380 = vmatprep.subr.mxu0 0.0
      %381 = vmatpush1.msra.mxu0 0.0
      %382 = vmatprep.subr.mxu0 0.0
      %383 = vmatpush1.msra.mxu0 0.0
      %384 = vmatprep.subr.mxu0 0.0
      %385 = vmatpush1.msra.mxu0 0.0
      %386 = vmatprep.subr.mxu0 0.0
      %387 = vmatpush1.msra.mxu0 0.0
      %388 = vmatprep.subr.mxu0 0.0
      %389 = vmatpush1.msra.mxu0 0.0
      %390 = vmatprep.subr.mxu0 0.0
      %391 = vmatpush1.msra.mxu0 0.0
      %392 = vmatprep.subr.mxu0 0.0
      %393 = vmatpush1.msra.mxu0 0.0
      %394 = vmatprep.subr.mxu0 0.0
      %395 = vmatpush1.msra.mxu0 0.0
      %396 = vmatprep.subr.mxu0 0.0
      %397 = vmatpush1.msra.mxu0 0.0
      %398 = vmatprep.subr.mxu0 0.0
      %399 = vmatpush1.msra.mxu0 0.0
      %400 = vmatprep.subr.mxu0 0.0
      %401 = vmatpush1.msra.mxu0 0.0
      %402 = vmatprep.subr.mxu0 0.0
      %403 = vmatpush1.msra.mxu0 0.0
      %404 = vmatprep.subr.mxu0 0.0
      %405 = vmatpush1.msra.mxu0 0.0
      %406 = vmatprep.subr.mxu0 0.0
      %407 = vmatpush1.msra.mxu0 0.0
      %408 = vmatprep.subr.mxu0 0.0
      %409 = vmatpush1.msra.mxu0 0.0
      %410 = vmatprep.subr.mxu0 0.0
      %411 = vmatpush1.msra.mxu0 0.0
      %412 = vmatprep.subr.mxu0 0.0
      %413 = vmatpush1.msra.mxu0 0.0
      %414 = vmatprep.subr.mxu0 0.0
      %415 = vmatpush1.msra.mxu0 0.0
      %416 = vmatprep.subr.mxu0 0.0
      %417 = vmatpush1.msra.mxu0 0.0
      %418 = vmatprep.subr.mxu0 0.0
      %419 = vmatpush1.msra.mxu0 0.0
      %420 = vmatprep.subr.mxu0 0.0
      %421 = vmatpush1.msra.mxu0 0.0
      %422 = vmatprep.subr.mxu0 0.0
      %423 = vmatpush1.msra.mxu0 0.0
      %424 = vmatprep.subr.mxu0 0.0
      %425 = vmatpush1.msra.mxu0 0.0
      %426 = vmatprep.subr.mxu0 0.0
      %427 = vmatpush1.msra.mxu0 0.0
      %428 = vmatprep.subr.mxu0 0.0
      %429 = vmatpush1.msra.mxu0 0.0
      %430 = vmatprep.subr.mxu0 0.0
      %431 = vmatpush1.msra.mxu0 0.0
      %432 = vmatprep.subr.mxu0 0.0
      %433 = vmatpush1.msra.mxu0 0.0
      %434 = vmatprep.subr.mxu0 0.0
      %435 = vmatpush1.msra.mxu0 0.0
      %436 = vmatprep.subr.mxu0 0.0
      %437 = vmatpush1.msra.mxu0 0.0
      %438 = vmatprep.subr.mxu0 0.0
      %439 = vmatpush1.msra.mxu0 0.0
      %440 = vmatprep.mubr.f32.mxu0 0.0
      %441 = vmatmul.mubr.f32.gmra.mrb[0].mxu0 %v355
      %v442 = vpop.f32.mrb[0].mxu0
      %v443 = vadd.f32 0.0, %v442
      %v444 = vpop.f32.mrb[0].mxu0
      %445 = vmatprep.mubr.f32.mxu0 0.0
      %446 = vmatmul.mubr.f32.gmra.mrb[0].mxu0 %v358
      %v447 = vpop.f32.mrb[0].mxu0
      %v448 = vadd.f32 0.0, %v447
      %v449 = vpop.f32.mrb[0].mxu0
      %450 = vmatprep.mubr.f32.mxu0 0.0
      %451 = vmatmul.mubr.f32.gmra.mrb[0].mxu0 %v361
      %v452 = vpop.f32.mrb[0].mxu0
      %v453 = vadd.f32 0.0, %v452
      %v454 = vpop.f32.mrb[0].mxu0
      %455 = vmatprep.mubr.f32.mxu0 0.0
      %456 = vmatmul.mubr.f32.gmra.mrb[0].mxu0 %v364
      %v457 = vpop.f32.mrb[0].mxu0
      %v458 = vadd.f32 0.0, %v457
      %v459 = vpop.f32.mrb[0].mxu0
      %460 = vmatprep.mubr.f32.mxu0 0.0
      %461 = vmatmul.mubr.f32.gmra.mrb[0].mxu0 %v367
      %v462 = vpop.f32.mrb[0].mxu0
      %v463 = vadd.f32 0.0, %v462
      %v464 = vpop.f32.mrb[0].mxu0
      %465 = vmatprep.mubr.f32.mxu0 0.0
      %466 = vmatmul.mubr.f32.gmra.mrb[0].mxu0 %v370
      %v467 = vpop.f32.mrb[0].mxu0
      %v468 = vadd.f32 0.0, %v467
      %v469 = vpop.f32.mrb[0].mxu0
      %470 = vdwg.mxu0
      %vm471 = vcmask 523264
      %v473 = vsel %vm471, %v453, 0
      %v476 = vsel %vm471, %v458, 0
      %478 = vmatprep.subr.mxu0 0.0
      %479 = vmatpush1.msra.mxu0 %v321
      %480 = vmatprep.subr.mxu0 0.0
      %481 = vmatpush1.msra.mxu0 %v322
      %482 = vmatprep.subr.mxu0 0.0
      %483 = vmatpush1.msra.mxu0 %v323
      %484 = vmatprep.subr.mxu0 0.0
      %485 = vmatpush1.msra.mxu0 %v324
      %486 = vmatprep.subr.mxu0 0.0
      %487 = vmatpush1.msra.mxu0 %v325
      %488 = vmatprep.subr.mxu0 0.0
      %489 = vmatpush1.msra.mxu0 %v326
      %490 = vmatprep.subr.mxu0 0.0
      %491 = vmatpush1.msra.mxu0 %v327
      %492 = vmatprep.subr.mxu0 0.0
      %493 = vmatpush1.msra.mxu0 %v328
      %494 = vmatprep.subr.mxu0 0.0
      %495 = vmatpush1.msra.mxu0 0.0
      %496 = vmatprep.subr.mxu0 0.0
      %497 = vmatpush1.msra.mxu0 0.0
      %498 = vmatprep.subr.mxu0 0.0
      %499 = vmatpush1.msra.mxu0 0.0
      %500 = vmatprep.subr.mxu0 0.0
      %501 = vmatpush1.msra.mxu0 0.0
      %502 = vmatprep.subr.mxu0 0.0
      %503 = vmatpush1.msra.mxu0 0.0
      %504 = vmatprep.subr.mxu0 0.0
      %505 = vmatpush1.msra.mxu0 0.0
      %506 = vmatprep.subr.mxu0 0.0
      %507 = vmatpush1.msra.mxu0 0.0
      %508 = vmatprep.subr.mxu0 0.0
      %509 = vmatpush1.msra.mxu0 0.0
      %510 = vmatprep.subr.mxu0 0.0
      %511 = vmatpush1.msra.mxu0 0.0
      %512 = vmatprep.subr.mxu0 0.0
      %513 = vmatpush1.msra.mxu0 0.0
      %514 = vmatprep.subr.mxu0 0.0
      %515 = vmatpush1.msra.mxu0 0.0
      %516 = vmatprep.subr.mxu0 0.0
      %517 = vmatpush1.msra.mxu0 0.0
      %518 = vmatprep.subr.mxu0 0.0
      %519 = vmatpush1.msra.mxu0 0.0
      %520 = vmatprep.subr.mxu0 0.0
      %521 = vmatpush1.msra.mxu0 0.0
      %522 = vmatprep.subr.mxu0 0.0
      %523 = vmatpush1.msra.mxu0 0.0
      %524 = vmatprep.subr.mxu0 0.0
      %525 = vmatpush1.msra.mxu0 0.0
      %526 = vmatprep.subr.mxu0 0.0
      %527 = vmatpush1.msra.mxu0 0.0
      %528 = vmatprep.subr.mxu0 0.0
      %529 = vmatpush1.msra.mxu0 0.0
      %530 = vmatprep.subr.mxu0 0.0
      %531 = vmatpush1.msra.mxu0 0.0
      %532 = vmatprep.subr.mxu0 0.0
      %533 = vmatpush1.msra.mxu0 0.0
      %534 = vmatprep.subr.mxu0 0.0
      %535 = vmatpush1.msra.mxu0 0.0
      %536 = vmatprep.subr.mxu0 0.0
      %537 = vmatpush1.msra.mxu0 0.0
      %538 = vmatprep.subr.mxu0 0.0
      %539 = vmatpush1.msra.mxu0 0.0
      %540 = vmatprep.subr.mxu0 0.0
      %541 = vmatpush1.msra.mxu0 0.0
      %542 = vmatprep.mubr.f32.mxu0 0.0
      %543 = vmatmul.mubr.f32.gmra.mrb[0].mxu0 %v473
      %v544 = vpop.f32.mrb[0].mxu0
      %v545 = vadd.f32 0.0, %v544
      %v546 = vpop.f32.mrb[0].mxu0
      %547 = vmatprep.mubr.f32.mxu0 0.0
      %548 = vmatmul.mubr.f32.gmra.mrb[0].mxu0 %v476
      %v549 = vpop.f32.mrb[0].mxu0
      %v550 = vadd.f32 0.0, %v549
      %v551 = vpop.f32.mrb[0].mxu0
      %552 = vdwg.mxu0
      %v554 = vsel %vm471, %v443, 0
      %v557 = vsel %vm471, %v448, 0
      %559 = vmatprep.subr.mxu0 0.0
      %560 = vmatpush1.msra.mxu0 %v312
      %561 = vmatprep.subr.mxu0 0.0
      %562 = vmatpush1.msra.mxu0 %v313
      %563 = vmatprep.subr.mxu0 0.0
      %564 = vmatpush1.msra.mxu0 %v314
      %565 = vmatprep.subr.mxu0 0.0
      %566 = vmatpush1.msra.mxu0 %v315
      %567 = vmatprep.subr.mxu0 0.0
      %568 = vmatpush1.msra.mxu0 %v316
      %569 = vmatprep.subr.mxu0 0.0
      %570 = vmatpush1.msra.mxu0 %v317
      %571 = vmatprep.subr.mxu0 0.0
      %572 = vmatpush1.msra.mxu0 %v318
      %573 = vmatprep.subr.mxu0 0.0
      %574 = vmatpush1.msra.mxu0 %v319
      %575 = vmatprep.subr.mxu0 0.0
      %576 = vmatpush1.msra.mxu0 0.0
      %577 = vmatprep.subr.mxu0 0.0
      %578 = vmatpush1.msra.mxu0 0.0
      %579 = vmatprep.subr.mxu0 0.0
      %580 = vmatpush1.msra.mxu0 0.0
      %581 = vmatprep.subr.mxu0 0.0
      %582 = vmatpush1.msra.mxu0 0.0
      %583 = vmatprep.subr.mxu0 0.0
      %584 = vmatpush1.msra.mxu0 0.0
      %585 = vmatprep.subr.mxu0 0.0
      %586 = vmatpush1.msra.mxu0 0.0
      %587 = vmatprep.subr.mxu0 0.0
      %588 = vmatpush1.msra.mxu0 0.0
      %589 = vmatprep.subr.mxu0 0.0
      %590 = vmatpush1.msra.mxu0 0.0
      %591 = vmatprep.subr.mxu0 0.0
      %592 = vmatpush1.msra.mxu0 0.0
      %593 = vmatprep.subr.mxu0 0.0
      %594 = vmatpush1.msra.mxu0 0.0
      %595 = vmatprep.subr.mxu0 0.0
      %596 = vmatpush1.msra.mxu0 0.0
      %597 = vmatprep.subr.mxu0 0.0
      %598 = vmatpush1.msra.mxu0 0.0
      %599 = vmatprep.subr.mxu0 0.0
      %600 = vmatpush1.msra.mxu0 0.0
      %601 = vmatprep.subr.mxu0 0.0
      %602 = vmatpush1.msra.mxu0 0.0
      %603 = vmatprep.subr.mxu0 0.0
      %604 = vmatpush1.msra.mxu0 0.0
      %605 = vmatprep.subr.mxu0 0.0
      %606 = vmatpush1.msra.mxu0 0.0
      %607 = vmatprep.subr.mxu0 0.0
      %608 = vmatpush1.msra.mxu0 0.0
      %609 = vmatprep.subr.mxu0 0.0
      %610 = vmatpush1.msra.mxu0 0.0
      %611 = vmatprep.subr.mxu0 0.0
      %612 = vmatpush1.msra.mxu0 0.0
      %613 = vmatprep.subr.mxu0 0.0
      %614 = vmatpush1.msra.mxu0 0.0
      %615 = vmatprep.subr.mxu0 0.0
      %616 = vmatpush1.msra.mxu0 0.0
      %617 = vmatprep.subr.mxu0 0.0
      %618 = vmatpush1.msra.mxu0 0.0
      %619 = vmatprep.subr.mxu0 0.0
      %620 = vmatpush1.msra.mxu0 0.0
      %621 = vmatprep.subr.mxu0 0.0
      %622 = vmatpush1.msra.mxu0 0.0
      %623 = vmatprep.mubr.f32.mxu0 0.0
      %624 = vmatmul.mubr.f32.gmra.mrb[0].mxu0 %v554
      %v625 = vpop.f32.mrb[0].mxu0
      %v626 = vadd.f32 %v545, %v625
      %v627 = vpop.f32.mrb[0].mxu0
      %628 = vmatprep.mubr.f32.mxu0 0.0
      %629 = vmatmul.mubr.f32.gmra.mrb[0].mxu0 %v557
      %v630 = vpop.f32.mrb[0].mxu0
      %v631 = vadd.f32 %v550, %v630
      %v632 = vpop.f32.mrb[0].mxu0
      %633 = vdwg.mxu0
      %v635 = vsel %vm471, %v463, 0
      %v638 = vsel %vm471, %v468, 0
      %640 = vmatprep.subr.mxu0 0.0
      %641 = vmatpush1.msra.mxu0 %v330
      %642 = vmatprep.subr.mxu0 0.0
      %643 = vmatpush1.msra.mxu0 %v331
      %644 = vmatprep.subr.mxu0 0.0
      %645 = vmatpush1.msra.mxu0 %v332
      %646 = vmatprep.subr.mxu0 0.0
      %647 = vmatpush1.msra.mxu0 %v333
      %648 = vmatprep.subr.mxu0 0.0
      %649 = vmatpush1.msra.mxu0 %v334
      %650 = vmatprep.subr.mxu0 0.0
      %651 = vmatpush1.msra.mxu0 %v335
      %652 = vmatprep.subr.mxu0 0.0
      %653 = vmatpush1.msra.mxu0 %v336
      %654 = vmatprep.subr.mxu0 0.0
      %655 = vmatpush1.msra.mxu0 %v337
      %656 = vmatprep.subr.mxu0 0.0
      %657 = vmatpush1.msra.mxu0 0.0
      %658 = vmatprep.subr.mxu0 0.0
      %659 = vmatpush1.msra.mxu0 0.0
      %660 = vmatprep.subr.mxu0 0.0
      %661 = vmatpush1.msra.mxu0 0.0
      %662 = vmatprep.subr.mxu0 0.0
      %663 = vmatpush1.msra.mxu0 0.0
      %664 = vmatprep.subr.mxu0 0.0
      %665 = vmatpush1.msra.mxu0 0.0
      %666 = vmatprep.subr.mxu0 0.0
      %667 = vmatpush1.msra.mxu0 0.0
      %668 = vmatprep.subr.mxu0 0.0
      %669 = vmatpush1.msra.mxu0 0.0
      %670 = vmatprep.subr.mxu0 0.0
      %671 = vmatpush1.msra.mxu0 0.0
      %672 = vmatprep.subr.mxu0 0.0
      %673 = vmatpush1.msra.mxu0 0.0
      %674 = vmatprep.subr.mxu0 0.0
      %675 = vmatpush1.msra.mxu0 0.0
      %676 = vmatprep.subr.mxu0 0.0
      %677 = vmatpush1.msra.mxu0 0.0
      %678 = vmatprep.subr.mxu0 0.0
      %679 = vmatpush1.msra.mxu0 0.0
      %680 = vmatprep.subr.mxu0 0.0
      %681 = vmatpush1.msra.mxu0 0.0
      %682 = vmatprep.subr.mxu0 0.0
      %683 = vmatpush1.msra.mxu0 0.0
      %684 = vmatprep.subr.mxu0 0.0
      %685 = vmatpush1.msra.mxu0 0.0
      %686 = vmatprep.subr.mxu0 0.0
      %687 = vmatpush1.msra.mxu0 0.0
      %688 = vmatprep.subr.mxu0 0.0
      %689 = vmatpush1.msra.mxu0 0.0
      %690 = vmatprep.subr.mxu0 0.0
      %691 = vmatpush1.msra.mxu0 0.0
      %692 = vmatprep.subr.mxu0 0.0
      %693 = vmatpush1.msra.mxu0 0.0
      %694 = vmatprep.subr.mxu0 0.0
      %695 = vmatpush1.msra.mxu0 0.0
      %696 = vmatprep.subr.mxu0 0.0
      %697 = vmatpush1.msra.mxu0 0.0
      %698 = vmatprep.subr.mxu0 0.0
      %699 = vmatpush1.msra.mxu0 0.0
      %700 = vmatprep.subr.mxu0 0.0
      %701 = vmatpush1.msra.mxu0 0.0
      %702 = vmatprep.subr.mxu0 0.0
      %703 = vmatpush1.msra.mxu0 0.0
      %704 = vmatprep.mubr.f32.mxu0 0.0
      %705 = vmatmul.mubr.f32.gmra.mrb[0].mxu0 %v635
      %v706 = vpop.f32.mrb[0].mxu0
      %v707 = vadd.f32 0.0, %v706
      %v708 = vpop.f32.mrb[0].mxu0
      %709 = vmatprep.mubr.f32.mxu0 0.0
      %710 = vmatmul.mubr.f32.gmra.mrb[0].mxu0 %v638
      %v711 = vpop.f32.mrb[0].mxu0
      %v712 = vadd.f32 0.0, %v711
      %v713 = vpop.f32.mrb[0].mxu0
      %714 = vdwg.mxu0
      %v715 = vadd.f32 %v626, %v707
      %v716 = vadd.f32 %v631, %v712
      %v717 = vadd.f32 %v715, %v298
      %v718 = vadd.f32 %v716, %v299
      %v719 = vmax.f32 %v717, 0.0
      %v720 = vmax.f32 %v718, 0.0
      %v721 = vmul.f32 %v719, %v300
      %v722 = vmul.f32 %v720, %v301
      %v723 = vadd.f32 %v721, %v302
      %v724 = vadd.f32 %v722, %v303
      %vm725 = vcmask 130048
      %v727 = vsel %vm725, %v282, 0
      %v730 = vsel %vm725, %v283, 0
      %v733 = vsel %vm725, %v284, 0
      %v736 = vsel %vm725, %v285, 0
      %v739 = vsel %vm725, %v286, 0
      %v742 = vsel %vm725, %v287, 0
      %v745 = vsel %vm725, %v288, 0
      %v748 = vsel %vm725, %v289, 0
      %v751 = vsel %vm725, %v290, 0
      %v754 = vsel %vm725, %v291, 0
      %v757 = vsel %vm725, %v292, 0
      %v760 = vsel %vm725, %v293, 0
      %762 = vmatprep.subr.mxu0 0.0
      %763 = vmatpush1.msra.mxu0 %v723
      %764 = vmatprep.subr.mxu0 0.0
      %765 = vmatpush1.msra.mxu0 %v724
      %766 = vmatprep.subr.mxu0 0.0
      %767 = vmatpush1.msra.mxu0 0.0
      %768 = vmatprep.subr.mxu0 0.0
      %769 = vmatpush1.msra.mxu0 0.0
      %770 = vmatprep.subr.mxu0 0.0
      %771 = vmatpush1.msra.mxu0 0.0
      %772 = vmatprep.subr.mxu0 0.0
      %773 = vmatpush1.msra.mxu0 0.0
      %774 = vmatprep.subr.mxu0 0.0
      %775 = vmatpush1.msra.mxu0 0.0
      %776 = vmatprep.subr.mxu0 0.0
      %777 = vmatpush1.msra.mxu0 0.0
      %778 = vmatprep.subr.mxu0 0.0
      %779 = vmatpush1.msra.mxu0 0.0
      %780 = vmatprep.subr.mxu0 0.0
      %781 = vmatpush1.msra.mxu0 0.0
      %782 = vmatprep.subr.mxu0 0.0
      %783 = vmatpush1.msra.mxu0 0.0
      %784 = vmatprep.subr.mxu0 0.0
      %785 = vmatpush1.msra.mxu0 0.0
      %786 = vmatprep.subr.mxu0 0.0
      %787 = vmatpush1.msra.mxu0 0.0
      %788 = vmatprep.subr.mxu0 0.0
      %789 = vmatpush1.msra.mxu0 0.0
      %790 = vmatprep.subr.mxu0 0.0
      %791 = vmatpush1.msra.mxu0 0.0
      %792 = vmatprep.subr.mxu0 0.0
      %793 = vmatpush1.msra.mxu0 0.0
      %794 = vmatprep.subr.mxu0 0.0
      %795 = vmatpush1.msra.mxu0 0.0
      %796 = vmatprep.subr.mxu0 0.0
      %797 = vmatpush1.msra.mxu0 0.0
      %798 = vmatprep.subr.mxu0 0.0
      %799 = vmatpush1.msra.mxu0 0.0
      %800 = vmatprep.subr.mxu0 0.0
      %801 = vmatpush1.msra.mxu0 0.0
      %802 = vmatprep.subr.mxu0 0.0
      %803 = vmatpush1.msra.mxu0 0.0
      %804 = vmatprep.subr.mxu0 0.0
      %805 = vmatpush1.msra.mxu0 0.0
      %806 = vmatprep.subr.mxu0 0.0
      %807 = vmatpush1.msra.mxu0 0.0
      %808 = vmatprep.subr.mxu0 0.0
      %809 = vmatpush1.msra.mxu0 0.0
      %810 = vmatprep.subr.mxu0 0.0
      %811 = vmatpush1.msra.mxu0 0.0
      %812 = vmatprep.subr.mxu0 0.0
      %813 = vmatpush1.msra.mxu0 0.0
      %814 = vmatprep.subr.mxu0 0.0
      %815 = vmatpush1.msra.mxu0 0.0
      %816 = vmatprep.subr.mxu0 0.0
      %817 = vmatpush1.msra.mxu0 0.0
      %818 = vmatprep.subr.mxu0 0.0
      %819 = vmatpush1.msra.mxu0 0.0
      %820 = vmatprep.subr.mxu0 0.0
      %821 = vmatpush1.msra.mxu0 0.0
      %822 = vmatprep.subr.mxu0 0.0
      %823 = vmatpush1.msra.mxu0 0.0
      %824 = vmatprep.subr.mxu0 0.0
      %825 = vmatpush1.msra.mxu0 0.0
      %826 = vmatprep.mubr.f32.mxu0 0.0
      %827 = vmatmul.mubr.f32.gmra.mrb[0].mxu0 %v727
      %v828 = vpop.f32.mrb[0].mxu0
      %v829 = vadd.f32 0.0, %v828
      %v830 = vpop.f32.mrb[0].mxu0
      %831 = vmatprep.mubr.f32.mxu0 0.0
      %832 = vmatmul.mubr.f32.gmra.mrb[0].mxu0 %v730
      %v833 = vpop.f32.mrb[0].mxu0
      %v834 = vadd.f32 0.0, %v833
      %v835 = vpop.f32.mrb[0].mxu0
      %836 = vmatprep.mubr.f32.mxu0 0.0
      %837 = vmatmul.mubr.f32.gmra.mrb[0].mxu0 %v733
      %v838 = vpop.f32.mrb[0].mxu0
      %v839 = vadd.f32 0.0, %v838
      %v840 = vpop.f32.mrb[0].mxu0
      %841 = vmatprep.mubr.f32.mxu0 0.0
      %842 = vmatmul.mubr.f32.gmra.mrb[0].mxu0 %v736
      %v843 = vpop.f32.mrb[0].mxu0
      %v844 = vadd.f32 0.0, %v843
      %v845 = vpop.f32.mrb[0].mxu0
      %846 = vmatprep.mubr.f32.mxu0 0.0
      %847 = vmatmul.mubr.f32.gmra.mrb[0].mxu0 %v739
      %v848 = vpop.f32.mrb[0].mxu0
      %v849 = vadd.f32 0.0, %v848
      %v850 = vpop.f32.mrb[0].mxu0
      %851 = vmatprep.mubr.f32.mxu0 0.0
      %852 = vmatmul.mubr.f32.gmra.mrb[0].mxu0 %v742
      %v853 = vpop.f32.mrb[0].mxu0
      %v854 = vadd.f32 0.0, %v853
      %v855 = vpop.f32.mrb[0].mxu0
      %856 = vmatprep.mubr.f32.mxu0 0.0
      %857 = vmatmul.mubr.f32.gmra.mrb[0].mxu0 %v745
      %v858 = vpop.f32.mrb[0].mxu0
      %v859 = vadd.f32 0.0, %v858
      %v860 = vpop.f32.mrb[0].mxu0
      %861 = vmatprep.mubr.f32.mxu0 0.0
      %862 = vmatmul.mubr.f32.gmra.mrb[0].mxu0 %v748
      %v863 = vpop.f32.mrb[0].mxu0
      %v864 = vadd.f32 0.0, %v863
      %v865 = vpop.f32.mrb[0].mxu0
      %866 = vmatprep.mubr.f32.mxu0 0.0
      %867 = vmatmul.mubr.f32.gmra.mrb[0].mxu0 %v751
      %v868 = vpop.f32.mrb[0].mxu0
      %v869 = vadd.f32 0.0, %v868
      %v870 = vpop.f32.mrb[0].mxu0
      %871 = vmatprep.mubr.f32.mxu0 0.0
      %872 = vmatmul.mubr.f32.gmra.mrb[0].mxu0 %v754
      %v873 = vpop.f32.mrb[0].mxu0
      %v874 = vadd.f32 0.0, %v873
      %v875 = vpop.f32.mrb[0].mxu0
      %876 = vmatprep.mubr.f32.mxu0 0.0
      %877 = vmatmul.mubr.f32.gmra.mrb[0].mxu0 %v757
      %v878 = vpop.f32.mrb[0].mxu0
      %v879 = vadd.f32 0.0, %v878
      %v880 = vpop.f32.mrb[0].mxu0
      %881 = vmatprep.mubr.f32.mxu0 0.0
      %882 = vmatmul.mubr.f32.gmra.mrb[0].mxu0 %v760
      %v883 = vpop.f32.mrb[0].mxu0
      %v884 = vadd.f32 0.0, %v883
      %v885 = vpop.f32.mrb[0].mxu0
      %886 = vdwg.mxu0
      %vm887 = vcmask 252928
      %v889 = vsel %vm887, %v849, 0
      %v892 = vsel %vm887, %v854, 0
      %v895 = vsel %vm887, %v859, 0
      %v898 = vsel %vm887, %v864, 0
      %vm900 = vcmask 1046528
      %v902 = vsel %vm900, %v346, 0
      %904 = vmatprep.subr.mxu0 0.0
      %905 = vmatpush1.msra.mxu0 %v343
      %906 = vmatprep.subr.mxu0 0.0
      %907 = vmatpush1.msra.mxu0 %v344
      %908 = vmatprep.subr.mxu0 0.0
      %909 = vmatpush1.msra.mxu0 %v345
      %910 = vmatprep.subr.mxu0 0.0
      %911 = vmatpush1.msra.mxu0 %v902
      %912 = vmatprep.subr.mxu0 0.0
      %913 = vmatpush1.msra.mxu0 0.0
      %914 = vmatprep.subr.mxu0 0.0
      %915 = vmatpush1.msra.mxu0 0.0
      %916 = vmatprep.subr.mxu0 0.0
      %917 = vmatpush1.msra.mxu0 0.0
      %918 = vmatprep.subr.mxu0 0.0
      %919 = vmatpush1.msra.mxu0 0.0
      %920 = vmatprep.subr.mxu0 0.0
      %921 = vmatpush1.msra.mxu0 0.0
      %922 = vmatprep.subr.mxu0 0.0
      %923 = vmatpush1.msra.mxu0 0.0
      %924 = vmatprep.subr.mxu0 0.0
      %925 = vmatpush1.msra.mxu0 0.0
      %926 = vmatprep.subr.mxu0 0.0
      %927 = vmatpush1.msra.mxu0 0.0
      %928 = vmatprep.subr.mxu0 0.0
      %929 = vmatpush1.msra.mxu0 0.0
      %930 = vmatprep.subr.mxu0 0.0
      %931 = vmatpush1.msra.mxu0 0.0
      %932 = vmatprep.subr.mxu0 0.0
      %933 = vmatpush1.msra.mxu0 0.0
      %934 = vmatprep.subr.mxu0 0.0
      %935 = vmatpush1.msra.mxu0 0.0
      %936 = vmatprep.subr.mxu0 0.0
      %937 = vmatpush1.msra.mxu0 0.0
      %938 = vmatprep.subr.mxu0 0.0
      %939 = vmatpush1.msra.mxu0 0.0
      %940 = vmatprep.subr.mxu0 0.0
      %941 = vmatpush1.msra.mxu0 0.0
      %942 = vmatprep.subr.mxu0 0.0
      %943 = vmatpush1.msra.mxu0 0.0
      %944 = vmatprep.subr.mxu0 0.0
      %945 = vmatpush1.msra.mxu0 0.0
      %946 = vmatprep.subr.mxu0 0.0
      %947 = vmatpush1.msra.mxu0 0.0
      %948 = vmatprep.subr.mxu0 0.0
      %949 = vmatpush1.msra.mxu0 0.0
      %950 = vmatprep.subr.mxu0 0.0
      %951 = vmatpush1.msra.mxu0 0.0
      %952 = vmatprep.subr.mxu0 0.0
      %953 = vmatpush1.msra.mxu0 0.0
      %954 = vmatprep.subr.mxu0 0.0
      %955 = vmatpush1.msra.mxu0 0.0
      %956 = vmatprep.subr.mxu0 0.0
      %957 = vmatpush1.msra.mxu0 0.0
      %958 = vmatprep.subr.mxu0 0.0
      %959 = vmatpush1.msra.mxu0 0.0
      %960 = vmatprep.subr.mxu0 0.0
      %961 = vmatpush1.msra.mxu0 0.0
      %962 = vmatprep.subr.mxu0 0.0
      %963 = vmatpush1.msra.mxu0 0.0
      %964 = vmatprep.subr.mxu0 0.0
      %965 = vmatpush1.msra.mxu0 0.0
      %966 = vmatprep.subr.mxu0 0.0
      %967 = vmatpush1.msra.mxu0 0.0
      %968 = vmatprep.mubr.f32.mxu0 0.0
      %969 = vmatmul.mubr.f32.gmra.mrb[0].mxu0 %v889
      %v970 = vpop.f32.mrb[0].mxu0
      %v971 = vadd.f32 0.0, %v970
      %v972 = vpop.f32.mrb[0].mxu0
      %973 = vmatprep.mubr.f32.mxu0 0.0
      %974 = vmatmul.mubr.f32.gmra.mrb[0].mxu0 %v892
      %v975 = vpop.f32.mrb[0].mxu0
      %v976 = vadd.f32 0.0, %v975
      %v977 = vpop.f32.mrb[0].mxu0
      %978 = vmatprep.mubr.f32.mxu0 0.0
      %979 = vmatmul.mubr.f32.gmra.mrb[0].mxu0 %v895
      %v980 = vpop.f32.mrb[0].mxu0
      %v981 = vadd.f32 0.0, %v980
      %v982 = vpop.f32.mrb[0].mxu0
      %983 = vmatprep.mubr.f32.mxu0 0.0
      %984 = vmatmul.mubr.f32.gmra.mrb[0].mxu0 %v898
      %v985 = vpop.f32.mrb[0].mxu0
      %v986 = vadd.f32 0.0, %v985
      %v987 = vpop.f32.mrb[0].mxu0
      %988 = vdwg.mxu0
      %v990 = vsel %vm887, %v829, 0
      %v993 = vsel %vm887, %v834, 0
      %v996 = vsel %vm887, %v839, 0
      %v999 = vsel %vm887, %v844, 0
      %v1002 = vsel %vm900, %v341, 0
      %1004 = vmatprep.subr.mxu0 0.0
      %1005 = vmatpush1.msra.mxu0 %v338
      %1006 = vmatprep.subr.mxu0 0.0
      %1007 = vmatpush1.msra.mxu0 %v339
      %1008 = vmatprep.subr.mxu0 0.0
      %1009 = vmatpush1.msra.mxu0 %v340
      %1010 = vmatprep.subr.mxu0 0.0
      %1011 = vmatpush1.msra.mxu0 %v1002
      %1012 = vmatprep.subr.mxu0 0.0
      %1013 = vmatpush1.msra.mxu0 0.0
      %1014 = vmatprep.subr.mxu0 0.0
      %1015 = vmatpush1.msra.mxu0 0.0
      %1016 = vmatprep.subr.mxu0 0.0
      %1017 = vmatpush1.msra.mxu0 0.0
      %1018 = vmatprep.subr.mxu0 0.0
      %1019 = vmatpush1.msra.mxu0 0.0
      %1020 = vmatprep.subr.mxu0 0.0
      %1021 = vmatpush1.msra.mxu0 0.0
      %1022 = vmatprep.subr.mxu0 0.0
      %1023 = vmatpush1.msra.mxu0 0.0
      %1024 = vmatprep.subr.mxu0 0.0
      %1025 = vmatpush1.msra.mxu0 0.0
      %1026 = vmatprep.subr.mxu0 0.0
      %1027 = vmatpush1.msra.mxu0 0.0
      %1028 = vmatprep.subr.mxu0 0.0
      %1029 = vmatpush1.msra.mxu0 0.0
      %1030 = vmatprep.subr.mxu0 0.0
      %1031 = vmatpush1.msra.mxu0 0.0
      %1032 = vmatprep.subr.mxu0 0.0
      %1033 = vmatpush1.msra.mxu0 0.0
      %1034 = vmatprep.subr.mxu0 0.0
      %1035 = vmatpush1.msra.mxu0 0.0
      %1036 = vmatprep.subr.mxu0 0.0
      %1037 = vmatpush1.msra.mxu0 0.0
      %1038 = vmatprep.subr.mxu0 0.0
      %1039 = vmatpush1.msra.mxu0 0.0
      %1040 = vmatprep.subr.mxu0 0.0
      %1041 = vmatpush1.msra.mxu0 0.0
      %1042 = vmatprep.subr.mxu0 0.0
      %1043 = vmatpush1.msra.mxu0 0.0
      %1044 = vmatprep.subr.mxu0 0.0
      %1045 = vmatpush1.msra.mxu0 0.0
      %1046 = vmatprep.subr.mxu0 0.0
      %1047 = vmatpush1.msra.mxu0 0.0
      %1048 = vmatprep.subr.mxu0 0.0
      %1049 = vmatpush1.msra.mxu0 0.0
      %1050 = vmatprep.subr.mxu0 0.0
      %1051 = vmatpush1.msra.mxu0 0.0
      %1052 = vmatprep.subr.mxu0 0.0
      %1053 = vmatpush1.msra.mxu0 0.0
      %1054 = vmatprep.subr.mxu0 0.0
      %1055 = vmatpush1.msra.mxu0 0.0
      %1056 = vmatprep.subr.mxu0 0.0
      %1057 = vmatpush1.msra.mxu0 0.0
      %1058 = vmatprep.subr.mxu0 0.0
      %1059 = vmatpush1.msra.mxu0 0.0
      %1060 = vmatprep.subr.mxu0 0.0
      %1061 = vmatpush1.msra.mxu0 0.0
      %1062 = vmatprep.subr.mxu0 0.0
      %1063 = vmatpush1.msra.mxu0 0.0
      %1064 = vmatprep.subr.mxu0 0.0
      %1065 = vmatpush1.msra.mxu0 0.0
      %1066 = vmatprep.subr.mxu0 0.0
      %1067 = vmatpush1.msra.mxu0 0.0
      %1068 = vmatprep.mubr.f32.mxu0 0.0
      %1069 = vmatmul.mubr.f32.gmra.mrb[0].mxu0 %v990
      %v1070 = vpop.f32.mrb[0].mxu0
      %v1071 = vadd.f32 %v971, %v1070
      %v1072 = vpop.f32.mrb[0].mxu0
      %1073 = vmatprep.mubr.f32.mxu0 0.0
      %1074 = vmatmul.mubr.f32.gmra.mrb[0].mxu0 %v993
      %v1075 = vpop.f32.mrb[0].mxu0
      %v1076 = vadd.f32 %v976, %v1075
      %v1077 = vpop.f32.mrb[0].mxu0
      %1078 = vmatprep.mubr.f32.mxu0 0.0
      %1079 = vmatmul.mubr.f32.gmra.mrb[0].mxu0 %v996
      %v1080 = vpop.f32.mrb[0].mxu0
      %v1081 = vadd.f32 %v981, %v1080
      %v1082 = vpop.f32.mrb[0].mxu0
      %1083 = vmatprep.mubr.f32.mxu0 0.0
      %1084 = vmatmul.mubr.f32.gmra.mrb[0].mxu0 %v999
      %v1085 = vpop.f32.mrb[0].mxu0
      %v1086 = vadd.f32 %v986, %v1085
      %v1087 = vpop.f32.mrb[0].mxu0
      %1088 = vdwg.mxu0
      %v1090 = vsel %vm887, %v869, 0
      %v1093 = vsel %vm887, %v874, 0
      %v1096 = vsel %vm887, %v879, 0
      %v1099 = vsel %vm887, %v884, 0
      %v1102 = vsel %vm900, %v351, 0
      %1104 = vmatprep.subr.mxu0 0.0
      %1105 = vmatpush1.msra.mxu0 %v348
      %1106 = vmatprep.subr.mxu0 0.0
      %1107 = vmatpush1.msra.mxu0 %v349
      %1108 = vmatprep.subr.mxu0 0.0
      %1109 = vmatpush1.msra.mxu0 %v350
      %1110 = vmatprep.subr.mxu0 0.0
      %1111 = vmatpush1.msra.mxu0 %v1102
      %1112 = vmatprep.subr.mxu0 0.0
      %1113 = vmatpush1.msra.mxu0 0.0
      %1114 = vmatprep.subr.mxu0 0.0
      %1115 = vmatpush1.msra.mxu0 0.0
      %1116 = vmatprep.subr.mxu0 0.0
      %1117 = vmatpush1.msra.mxu0 0.0
      %1118 = vmatprep.subr.mxu0 0.0
      %1119 = vmatpush1.msra.mxu0 0.0
      %1120 = vmatprep.subr.mxu0 0.0
      %1121 = vmatpush1.msra.mxu0 0.0
      %1122 = vmatprep.subr.mxu0 0.0
      %1123 = vmatpush1.msra.mxu0 0.0
      %1124 = vmatprep.subr.mxu0 0.0
      %1125 = vmatpush1.msra.mxu0 0.0
      %1126 = vmatprep.subr.mxu0 0.0
      %1127 = vmatpush1.msra.mxu0 0.0
      %1128 = vmatprep.subr.mxu0 0.0
      %1129 = vmatpush1.msra.mxu0 0.0
      %1130 = vmatprep.subr.mxu0 0.0
      %1131 = vmatpush1.msra.mxu0 0.0
      %1132 = vmatprep.subr.mxu0 0.0
      %1133 = vmatpush1.msra.mxu0 0.0
      %1134 = vmatprep.subr.mxu0 0.0
      %1135 = vmatpush1.msra.mxu0 0.0
      %1136 = vmatprep.subr.mxu0 0.0
      %1137 = vmatpush1.msra.mxu0 0.0
      %1138 = vmatprep.subr.mxu0 0.0
      %1139 = vmatpush1.msra.mxu0 0.0
      %1140 = vmatprep.subr.mxu0 0.0
      %1141 = vmatpush1.msra.mxu0 0.0
      %1142 = vmatprep.subr.mxu0 0.0
      %1143 = vmatpush1.msra.mxu0 0.0
      %1144 = vmatprep.subr.mxu0 0.0
      %1145 = vmatpush1.msra.mxu0 0.0
      %1146 = vmatprep.subr.mxu0 0.0
      %1147 = vmatpush1.msra.mxu0 0.0
      %1148 = vmatprep.subr.mxu0 0.0
      %1149 = vmatpush1.msra.mxu0 0.0
      %1150 = vmatprep.subr.mxu0 0.0
      %1151 = vmatpush1.msra.mxu0 0.0
      %1152 = vmatprep.subr.mxu0 0.0
      %1153 = vmatpush1.msra.mxu0 0.0
      %1154 = vmatprep.subr.mxu0 0.0
      %1155 = vmatpush1.msra.mxu0 0.0
      %1156 = vmatprep.subr.mxu0 0.0
      %1157 = vmatpush1.msra.mxu0 0.0
      %1158 = vmatprep.subr.mxu0 0.0
      %1159 = vmatpush1.msra.mxu0 0.0
      %1160 = vmatprep.subr.mxu0 0.0
      %1161 = vmatpush1.msra.mxu0 0.0
      %1162 = vmatprep.subr.mxu0 0.0
      %1163 = vmatpush1.msra.mxu0 0.0
      %1164 = vmatprep.subr.mxu0 0.0
      %1165 = vmatpush1.msra.mxu0 0.0
      %1166 = vmatprep.subr.mxu0 0.0
      %1167 = vmatpush1.msra.mxu0 0.0
      %1168 = vmatprep.mubr.f32.mxu0 0.0
      %1169 = vmatmul.mubr.f32.gmra.mrb[0].mxu0 %v1090
      %v1170 = vpop.f32.mrb[0].mxu0
      %v1171 = vadd.f32 0.0, %v1170
      %v1172 = vpop.f32.mrb[0].mxu0
      %1173 = vmatprep.mubr.f32.mxu0 0.0
      %1174 = vmatmul.mubr.f32.gmra.mrb[0].mxu0 %v1093
      %v1175 = vpop.f32.mrb[0].mxu0
      %v1176 = vadd.f32 0.0, %v1175
      %v1177 = vpop.f32.mrb[0].mxu0
      %1178 = vmatprep.mubr.f32.mxu0 0.0
      %1179 = vmatmul.mubr.f32.gmra.mrb[0].mxu0 %v1096
      %v1180 = vpop.f32.mrb[0].mxu0
      %v1181 = vadd.f32 0.0, %v1180
      %v1182 = vpop.f32.mrb[0].mxu0
      %1183 = vmatprep.mubr.f32.mxu0 0.0
      %1184 = vmatmul.mubr.f32.gmra.mrb[0].mxu0 %v1099
      %v1185 = vpop.f32.mrb[0].mxu0
      %v1186 = vadd.f32 0.0, %v1185
      %v1187 = vpop.f32.mrb[0].mxu0
      %1188 = vdwg.mxu0
      %v1189 = vadd.f32 %v1071, %v1171
      %v1190 = vadd.f32 %v1076, %v1176
      %v1191 = vadd.f32 %v1081, %v1181
      %v1192 = vadd.f32 %v1086, %v1186
      %v1193 = vmul.f32 %v1189, %v304
      %v1194 = vmul.f32 %v1190, %v305
      %v1195 = vmul.f32 %v1191, %v306
      %v1196 = vmul.f32 %v1192, %v307
      %v1197 = vadd.f32 %v1193, %v308
      %v1198 = vadd.f32 %v1194, %v309
      %v1199 = vadd.f32 %v1195, %v310
      %v1200 = vadd.f32 %v1196, %v311
      %v1201 = vmax.f32 %v1197, 0.0
      %v1202 = vmax.f32 %v1198, 0.0
      %v1203 = vmin.f32 %v1201, 6.0
      %v1204 = vmin.f32 %v1202, 6.0
      %v1205 = vsub.f32 0.0, %v1199
      %v1206 = vsub.f32 0.0, %v1200
      %v1207 = vmul.f32 %v1205, 1.442695
      %v1208 = vpow.pop %v1207
      %v1209 = vmul.f32 %v1206, 1.442695
      %v1210 = vpow.pop %v1209
      %v1211 = vadd.f32 %v1208, 1.0
      %v1212 = vadd.f32 %v1210, 1.0
      %v1213 = vrcp.pop %v1211
      %v1214 = vrcp.pop %v1212
      %v1216 = vsel %vm887, %v723, 0
      %v1219 = vsel %vm887, %v724, 0
      %v1222 = vsel %vm887, %v1203, 0
      %v1225 = vsel %vm887, %v1204, 0
      %v1228 = vsel %vm887, %v1213, 0
      %v1231 = vsel %vm887, %v1214, 0
      %v1234 = vsel %vm900, %v297, 0
      %1236 = vmatprep.subr.mxu0 0.0
      %1237 = vmatpush1.msra.mxu0 %v294
      %1238 = vmatprep.subr.mxu0 0.0
      %1239 = vmatpush1.msra.mxu0 %v295
      %1240 = vmatprep.subr.mxu0 0.0
      %1241 = vmatpush1.msra.mxu0 %v296
      %1242 = vmatprep.subr.mxu0 0.0
      %1243 = vmatpush1.msra.mxu0 %v1234
      %1244 = vmatprep.subr.mxu0 0.0
      %1245 = vmatpush1.msra.mxu0 0.0
      %1246 = vmatprep.subr.mxu0 0.0
      %1247 = vmatpush1.msra.mxu0 0.0
      %1248 = vmatprep.subr.mxu0 0.0
      %1249 = vmatpush1.msra.mxu0 0.0
      %1250 = vmatprep.subr.mxu0 0.0
      %1251 = vmatpush1.msra.mxu0 0.0
      %1252 = vmatprep.subr.mxu0 0.0
      %1253 = vmatpush1.msra.mxu0 0.0
      %1254 = vmatprep.subr.mxu0 0.0
      %1255 = vmatpush1.msra.mxu0 0.0
      %1256 = vmatprep.subr.mxu0 0.0
      %1257 = vmatpush1.msra.mxu0 0.0
      %1258 = vmatprep.subr.mxu0 0.0
      %1259 = vmatpush1.msra.mxu0 0.0
      %1260 = vmatprep.subr.mxu0 0.0
      %1261 = vmatpush1.msra.mxu0 0.0
      %1262 = vmatprep.subr.mxu0 0.0
      %1263 = vmatpush1.msra.mxu0 0.0
      %1264 = vmatprep.subr.mxu0 0.0
      %1265 = vmatpush1.msra.mxu0 0.0
      %1266 = vmatprep.subr.mxu0 0.0
      %1267 = vmatpush1.msra.mxu0 0.0
      %1268 = vmatprep.subr.mxu0 0.0
      %1269 = vmatpush1.msra.mxu0 0.0
      %1270 = vmatprep.subr.mxu0 0.0
      %1271 = vmatpush1.msra.mxu0 0.0
      %1272 = vmatprep.subr.mxu0 0.0
      %1273 = vmatpush1.msra.mxu0 0.0
      %1274 = vmatprep.subr.mxu0 0.0
      %1275 = vmatpush1.msra.mxu0 0.0
      %1276 = vmatprep.subr.mxu0 0.0
      %1277 = vmatpush1.msra.mxu0 0.0
      %1278 = vmatprep.subr.mxu0 0.0
      %1279 = vmatpush1.msra.mxu0 0.0
      %1280 = vmatprep.subr.mxu0 0.0
      %1281 = vmatpush1.msra.mxu0 0.0
      %1282 = vmatprep.subr.mxu0 0.0
      %1283 = vmatpush1.msra.mxu0 0.0
      %1284 = vmatprep.subr.mxu0 0.0
      %1285 = vmatpush1.msra.mxu0 0.0
      %1286 = vmatprep.subr.mxu0 0.0
      %1287 = vmatpush1.msra.mxu0 0.0
      %1288 = vmatprep.subr.mxu0 0.0
      %1289 = vmatpush1.msra.mxu0 0.0
      %1290 = vmatprep.subr.mxu0 0.0
      %1291 = vmatpush1.msra.mxu0 0.0
      %1292 = vmatprep.subr.mxu0 0.0
      %1293 = vmatpush1.msra.mxu0 0.0
      %1294 = vmatprep.subr.mxu0 0.0
      %1295 = vmatpush1.msra.mxu0 0.0
      %1296 = vmatprep.subr.mxu0 0.0
      %1297 = vmatpush1.msra.mxu0 0.0
      %1298 = vmatprep.subr.mxu0 0.0
      %1299 = vmatpush1.msra.mxu0 0.0
      %1300 = vmatprep.mubr.f32.mxu0 0.0
      %1301 = vmatmul.mubr.f32.gmra.mrb[0].mxu0 %v1216
      %v1302 = vpop.f32.mrb[0].mxu0
      %v1303 = vadd.f32 0.0, %v1302
      %v1304 = vpop.f32.mrb[0].mxu0
      %1305 = vmatprep.mubr.f32.mxu0 0.0
      %1306 = vmatmul.mubr.f32.gmra.mrb[0].mxu0 %v1219
      %v1307 = vpop.f32.mrb[0].mxu0
      %v1308 = vadd.f32 0.0, %v1307
      %v1309 = vpop.f32.mrb[0].mxu0
      %1310 = vmatprep.mubr.f32.mxu0 0.0
      %1311 = vmatmul.mubr.f32.gmra.mrb[0].mxu0 %v1222
      %v1312 = vpop.f32.mrb[0].mxu0
      %v1313 = vadd.f32 0.0, %v1312
      %v1314 = vpop.f32.mrb[0].mxu0
      %1315 = vmatprep.mubr.f32.mxu0 0.0
      %1316 = vmatmul.mubr.f32.gmra.mrb[0].mxu0 %v1225
      %v1317 = vpop.f32.mrb[0].mxu0
      %v1318 = vadd.f32 0.0, %v1317
      %v1319 = vpop.f32.mrb[0].mxu0
      %1320 = vmatprep.mubr.f32.mxu0 0.0
      %1321 = vmatmul.mubr.f32.gmra.mrb[0].mxu0 %v1228
      %v1322 = vpop.f32.mrb[0].mxu0
      %v1323 = vadd.f32 0.0, %v1322
      %v1324 = vpop.f32.mrb[0].mxu0
      %1325 = vmatprep.mubr.f32.mxu0 0.0
      %1326 = vmatmul.mubr.f32.gmra.mrb[0].mxu0 %v1231
      %v1327 = vpop.f32.mrb[0].mxu0
      %v1328 = vadd.f32 0.0, %v1327
      %v1329 = vpop.f32.mrb[0].mxu0
      %1330 = vdwg.mxu0
      %1337 = vrot.lane.b32.xlu0 %v1303, 125
      %v1338 = vpop.permute.xlu0 %1337
      %1339 = vrot.lane.b32.xlu0 %v1308, 125
      %v1340 = vpop.permute.xlu0 %1339
      %1341 = vrot.lane.b32.xlu0 %v1313, 125
      %v1342 = vpop.permute.xlu0 %1341
      %1343 = vrot.lane.b32.xlu0 %v1318, 125
      %v1344 = vpop.permute.xlu0 %1343
      %1345 = vrot.lane.b32.xlu0 %v1323, 125
      %v1346 = vpop.permute.xlu0 %1345
      %1347 = vrot.lane.b32.xlu0 %v1328, 125
      %v1348 = vpop.permute.xlu0 %1347
      %v1355 = vmax.f32 %v1303, %v1338
      %v1356 = vmax.f32 %v1308, %v1340
      %v1357 = vmax.f32 %v1313, %v1342
      %v1358 = vmax.f32 %v1318, %v1344
      %v1359 = vmax.f32 %v1323, %v1346
      %v1360 = vmax.f32 %v1328, %v1348
      %1361 = vrot.lane.b32.xlu0 %v1303, 122
      %v1362 = vpop.permute.xlu0 %1361
      %1363 = vrot.lane.b32.xlu0 %v1308, 122
      %v1364 = vpop.permute.xlu0 %1363
      %1365 = vrot.lane.b32.xlu0 %v1313, 122
      %v1366 = vpop.permute.xlu0 %1365
      %1367 = vrot.lane.b32.xlu0 %v1318, 122
      %v1368 = vpop.permute.xlu0 %1367
      %1369 = vrot.lane.b32.xlu0 %v1323, 122
      %v1370 = vpop.permute.xlu0 %1369
      %1371 = vrot.lane.b32.xlu0 %v1328, 122
      %v1372 = vpop.permute.xlu0 %1371
      %v1379 = vmax.f32 %v1355, %v1362
      %v1380 = vmax.f32 %v1356, %v1364
      %v1381 = vmax.f32 %v1357, %v1366
      %v1382 = vmax.f32 %v1358, %v1368
      %v1383 = vmax.f32 %v1359, %v1370
      %v1384 = vmax.f32 %v1360, %v1372
      %1385 = vst.msk [vmem:[%s275] sm:$0xff] %vm353, %v1379
      %1386 = vst.msk [vmem:[%s275 + $0x8] sm:$0xff] %vm353, %v1380
      %1387 = vst.msk [vmem:[%s275 + $0x10] sm:$0xff] %vm353, %v1381
      %1388 = vst.msk [vmem:[%s275 + $0x18] sm:$0xff] %vm353, %v1382
      %1389 = vst.msk [vmem:[%s275 + $0x20] sm:$0xff] %vm353, %v1383
      %1390 = vst.msk [vmem:[%s275 + $0x28] sm:$0xff] %vm353, %v1384
      %p1391 = scmp.lt.s32.totalorder %s18, 1
      %s1392 = scalar_select %p1391, %s18, 1
      %s1393 = smul.addr %s1392, 6
      %s1394 = smul.addr %s1393, 8
      %s1395 = scalar_lea.vmem %s7, %s1394
      // Predicated region
      $region49: #{test_block23_forward.1} parent=47 // pred_check
        %p1396 = pneg %p188
      $region50: #{test_block23_forward.1} parent=47 // pred_check_branch
        %1398 = sbr.rel (%p1396) target = $region52
      $region51: #{test_block23_forward.1} parent=47 // pred_region
        _
      $region52: #{test_block23_forward.1} parent=47 // pred_fallthru
        _
    $region48: #{test_block23_forward.1} parent=5 // pred_fallthru
      _
    %p1399 = scmp.le.s32.totalorder 2, %s13
    // Predicated region
    $region53: #{test_block23_forward.1} parent=5 // pred_check
      %p1400 = pneg %p1399
    $region54: #{test_block23_forward.1} parent=5 // pred_check_branch
      %1402 = sbr.rel (%p1400) target = $region56
    $region55: #{test_block23_forward.1} parent=5 // pred_region
      %s1403 = ssub.s32 %s13, 2
      // Predicated region
      $region57: #{test_block23_forward.1} parent=55 // pred_check
        %p1404 = pneg %p194
      $region58: #{test_block23_forward.1} parent=55 // pred_check_branch
        %1406 = sbr.rel (%p1404) target = $region60
      $region59: #{test_block23_forward.1} parent=55 // pred_region
        %p1407 = scmp.lt.s32.totalorder %s19, 1
        %s1408 = scalar_select %p1407, %s19, 1
        %s1409 = smul.addr %s1408, 6
        %s1410 = smul.addr %s1409, 8
        %s1411 = scalar_lea.vmem %s7, %s1410
      $region60: #{test_block23_forward.1} parent=55 // pred_fallthru
        _
    $region56: #{test_block23_forward.1} parent=5 // pred_fallthru
      _
  $region6: #{test_block23_forward.1} parent=0 // loop_footer
    %s17 = sadd.s32 1, %s13
  $region7: #{test_block23_forward.1} parent=0 // loop_footer_branch
    %12 = sbr.rel target = $region3
  $region8: #{test_block23_forward.1} parent=0 // loop_exit
    _

</llo_original>
